<compile_context>
chip_gen: v6e
topology: v6e:2x2x1
jax: 0.10.0
libtpu: 0.0.40
codegen_flags: <defaults>
</compile_context>

<pallas_src>
import functools

import jax
import jax.numpy as jnp
from jax import lax
from jax.experimental import pallas as pl
from jax.experimental.pallas import tpu as pltpu

H1, H2, H3, H4 = 1024, 512, 256, 1

# dot_general dimension numbers for A (m,k) x B (n,k) -> (m,n)  ("NT" matmul).
_NT_DIMS = (((1,), (1,)), ((), ()))


def _round_up(n, m):
    return ((n + m - 1) // m) * m


def _pick_batch_tile(B, max_tile=512):
    """Choose the batch tile.

    Goals (from the perf review):
      * large tiles (up to `max_tile`) to amortize the ~0.35us per-grid-step
        pipeline overhead on v6e/v7x,
      * an even grid length >= 2 whenever B > 256 so the "parallel" batch axis
        keeps both v7x TensorCores busy with no tail bubble,
      * small single tile for tiny batches (no point padding).
    """
    if B <= 256:
        return _round_up(max(B, 8), 8)
    n_tiles = max(2, -(-B // max_tile))
    if n_tiles % 2:
        n_tiles += 1
    return _round_up(-(-B // n_tiles), 8)


def _leaky_relu(x, slope=0.2):
    return jnp.where(x > 0, x, slope * x)


def _mlp_kernel(x_ref,
                w1_ref, b1_ref,
                w2_ref, b2_ref,
                w3_ref, b3_ref,
                w4_ref, b4_ref,
                o_ref):
    # Layer 1-3: bf16 operands on the MXU, f32 accumulation, bias + LeakyReLU in f32.
    x = x_ref[...].astype(jnp.bfloat16)          # cast fused into the kernel
    h = jnp.dot(x, w1_ref[...], preferred_element_type=jnp.float32) + b1_ref[...]
    h = _leaky_relu(h).astype(jnp.bfloat16)

    h = jnp.dot(h, w2_ref[...], preferred_element_type=jnp.float32) + b2_ref[...]
    h = _leaky_relu(h).astype(jnp.bfloat16)

    h = jnp.dot(h, w3_ref[...], preferred_element_type=jnp.float32) + b3_ref[...]
    h = _leaky_relu(h)                           # (batch_tile, 256), f32

    # Layer 4 (256 -> 1), produced directly as a lane-dense row:
    #   w4 (8, 256) [row-replicated]  x  h (batch_tile, 256), contracting last dims
    #   -> (8, batch_tile); keep sublane 0.  Tiny MXU pass, no column->row relayout.
    o8 = lax.dot_general(w4_ref[...], h, _NT_DIMS,
                         preferred_element_type=jnp.float32)   # (8, batch_tile)
    o_row = o8[0:1, :] + b4_ref[0, 0]                          # (1, batch_tile)

    o_ref[0] = o_row.astype(o_ref.dtype)         # block (1, 1, batch_tile): dense store


def discriminator_forward(x, params, *, max_batch_tile=512):
    """x: (B, input_dim) float32.  Returns (B, 1) float32."""
    (w1, b1), (w2, b2), (w3, b3), (w4, b4) = params
    B, D = x.shape

    batch_tile = _pick_batch_tile(B, max_batch_tile)
    B_pad = _round_up(B, batch_tile)
    if B_pad != B:
        x = jnp.pad(x, ((0, B_pad - B), (0, 0)))
    num_tiles = B_pad // batch_tile

    # bf16 matmul operands for the three big layers, f32 biases / accumulation.
    w1_bf = w1.astype(jnp.bfloat16)
    w2_bf = w2.astype(jnp.bfloat16)
    w3_bf = w3.astype(jnp.bfloat16)
    b1_f = b1.reshape(1, H1).astype(jnp.float32)
    b2_f = b2.reshape(1, H2).astype(jnp.float32)
    b3_f = b3.reshape(1, H3).astype(jnp.float32)
    # Final layer: (256,1) column -> row, replicated to 8 sublanes so the last
    # matmul has a clean (8, 256) lhs.  Kept in f32 (it is tiny).
    w4_row8 = jnp.broadcast_to(w4.reshape(1, H3), (8, H3)).astype(jnp.float32)
    b4_s = b4.reshape(1, 1).astype(jnp.float32)   # scalar, lives in SMEM

    def rep(i):          # weights/biases stay resident across the batch grid
        return (0, 0)

    layer_flops = D * H1 + H1 * H2 + H2 * H3 + H3
    cost = pl.CostEstimate(
        flops=2 * B_pad * layer_flops,
        transcendentals=0,
        bytes_accessed=(B_pad * D * 4                      # x (f32 in)
                        + 2 * (D * H1 + H1 * H2 + H2 * H3)  # bf16 weights
                        + 4 * (8 * H3 + H1 + H2 + H3 + 1)   # w4 + biases
                        + B_pad * 4),                       # output
    )

    out = pl.pallas_call(
        _mlp_kernel,
        out_shape=jax.ShapeDtypeStruct((num_tiles, 1, batch_tile), jnp.float32),
        grid_spec=pltpu.PrefetchScalarGridSpec(
            num_scalar_prefetch=0,
            grid=(num_tiles,),
            in_specs=[
                pl.BlockSpec((batch_tile, D), lambda i: (i, 0)),
                pl.BlockSpec((D, H1), rep), pl.BlockSpec((1, H1), rep),
                pl.BlockSpec((H1, H2), rep), pl.BlockSpec((1, H2), rep),
                pl.BlockSpec((H2, H3), rep), pl.BlockSpec((1, H3), rep),
                pl.BlockSpec((8, H3), rep),
                pl.BlockSpec(memory_space=pltpu.MemorySpace.SMEM),   # b4 scalar
            ],
            out_specs=pl.BlockSpec((1, 1, batch_tile), lambda i: (i, 0, 0)),
        ),
        compiler_params=pltpu.CompilerParams(
            dimension_semantics=("parallel",),
            vmem_limit_bytes=32 * 1024 * 1024,
        ),
        cost_estimate=cost,
    )(x, w1_bf, b1_f, w2_bf, b2_f, w3_bf, b3_f, w4_row8, b4_s)

    out = out.reshape(B_pad, 1)
    return out[:B] if B_pad != B else out


def init_params(key, input_dim):
    """Deterministic init mimicking PyTorch nn.Linear default (U[-1/sqrt(fan_in), +])."""
    dims = [(input_dim, H1), (H1, H2), (H2, H3), (H3, H4)]
    params = []
    for (fan_in, fan_out) in dims:
        key, kw, kb = jax.random.split(key, 3)
        bound = 1.0 / (fan_in ** 0.5)
        w = jax.random.uniform(kw, (fan_in, fan_out), jnp.float32, -bound, bound)
        b = jax.random.uniform(kb, (1, fan_out), jnp.float32, -bound, bound)
        params.append((w, b))
    return params


def reference_forward(x, params):
    """Pure-JAX reference matching the kernel's numerics (bf16 operands, f32 accum)."""
    (w1, b1), (w2, b2), (w3, b3), (w4, b4) = params
    h = x.astype(jnp.bfloat16)
    h = jnp.dot(h, w1.astype(jnp.bfloat16), preferred_element_type=jnp.float32) + b1
    h = jnp.where(h > 0, h, 0.2 * h).astype(jnp.bfloat16)
    h = jnp.dot(h, w2.astype(jnp.bfloat16), preferred_element_type=jnp.float32) + b2
    h = jnp.where(h > 0, h, 0.2 * h).astype(jnp.bfloat16)
    h = jnp.dot(h, w3.astype(jnp.bfloat16), preferred_element_type=jnp.float32) + b3
    h = jnp.where(h > 0, h, 0.2 * h)                       # f32, (B, 256)
    return jnp.dot(h, w4.astype(jnp.float32),
                   precision=lax.Precision.HIGHEST) + b4   # (B, 1)


if __name__ == "__main__":
    key = jax.random.PRNGKey(0)
    input_dim = 32
    batch = 8

    kx, kp = jax.random.split(key)
    x = jax.random.normal(kx, (batch, input_dim), jnp.float32)
    params = init_params(kp, input_dim)

    fwd = jax.jit(functools.partial(discriminator_forward, max_batch_tile=512))
    out = jax.block_until_ready(fwd(x, params))

    ref = reference_forward(x, params)
    assert out.shape == (batch, 1), out.shape
    max_err = float(jnp.max(jnp.abs(out - ref)))
    assert jnp.allclose(out, ref, atol=1e-2, rtol=1e-2), max_err

    print("KERNEL_OK")
</pallas_src>

<mosaic_0001>
module attributes {stable_mosaic.version = 11 : i64} {
  func.func @_mlp_kernel(%arg0: i32, %arg1: memref<8x32xf32, #tpu.memory_space<vmem>>, %arg2: memref<32x1024xbf16, #tpu.memory_space<vmem>>, %arg3: memref<1x1024xf32, #tpu.memory_space<vmem>>, %arg4: memref<1024x512xbf16, #tpu.memory_space<vmem>>, %arg5: memref<1x512xf32, #tpu.memory_space<vmem>>, %arg6: memref<512x256xbf16, #tpu.memory_space<vmem>>, %arg7: memref<1x256xf32, #tpu.memory_space<vmem>>, %arg8: memref<8x256xf32, #tpu.memory_space<vmem>>, %arg9: memref<1x1xf32, #tpu.memory_space<smem>>, %arg10: memref<1x1x8xf32, #tpu.memory_space<vmem>>) attributes {dimension_semantics = [#tpu.dimension_semantics<parallel>], iteration_bounds = array<i64: 1>, scalar_prefetch = 0 : i64, scratch_operands = 0 : i64, tpu.core_type = #tpu.core_type<tc>, window_params = [{transform_indices = @transform_0, window_bounds = array<i64: 8, 32>}, {pipeline_mode = #tpu.pipeline_mode<synchronous>, transform_indices = @transform_1, window_bounds = array<i64: 32, 1024>}, {pipeline_mode = #tpu.pipeline_mode<synchronous>, transform_indices = @transform_2, window_bounds = array<i64: 1, 1024>}, {pipeline_mode = #tpu.pipeline_mode<synchronous>, transform_indices = @transform_3, window_bounds = array<i64: 1024, 512>}, {pipeline_mode = #tpu.pipeline_mode<synchronous>, transform_indices = @transform_4, window_bounds = array<i64: 1, 512>}, {pipeline_mode = #tpu.pipeline_mode<synchronous>, transform_indices = @transform_5, window_bounds = array<i64: 512, 256>}, {pipeline_mode = #tpu.pipeline_mode<synchronous>, transform_indices = @transform_6, window_bounds = array<i64: 1, 256>}, {pipeline_mode = #tpu.pipeline_mode<synchronous>, transform_indices = @transform_7, window_bounds = array<i64: 8, 256>}, {transform_indices = @transform_8, window_bounds = array<i64: 1, 1>}, {transform_indices = @transform_9, window_bounds = array<i64: 1, 1, 8>}]} {
    %c0 = arith.constant 0 : index
    %c0_0 = arith.constant 0 : index
    %0 = vector.load %arg1[%c0, %c0_0] : memref<8x32xf32, #tpu.memory_space<vmem>>, vector<8x32xf32>
    %1 = arith.truncf %0 : vector<8x32xf32> to vector<8x32xbf16>
    %c0_1 = arith.constant 0 : index
    %c0_2 = arith.constant 0 : index
    %2 = vector.load %arg2[%c0_1, %c0_2] : memref<32x1024xbf16, #tpu.memory_space<vmem>>, vector<32x1024xbf16>
    %cst = arith.constant dense<0.000000e+00> : vector<8x1024xf32>
    %3 = tpu.matmul %1, %2, %cst {dimension_numbers = #tpu.dot_dimension_numbers<[1], [0], [0], [1], [0, 0, 1, 1], [], []>} : vector<8x32xbf16>, vector<32x1024xbf16>, vector<8x1024xf32> -> vector<8x1024xf32>
    %c0_3 = arith.constant 0 : index
    %c0_4 = arith.constant 0 : index
    %4 = vector.load %arg3[%c0_3, %c0_4] : memref<1x1024xf32, #tpu.memory_space<vmem>>, vector<1x1024xf32>
    %5 = vector.broadcast %4 : vector<1x1024xf32> to vector<8x1024xf32>
    %6 = arith.addf %3, %5 : vector<8x1024xf32>
    %cst_5 = arith.constant 0.000000e+00 : f32
    %7 = vector.broadcast %cst_5 : f32 to vector<8x1024xf32>
    %8 = arith.cmpf ogt, %6, %7 : vector<8x1024xf32>
    %cst_6 = arith.constant 2.000000e-01 : f32
    %9 = vector.broadcast %cst_6 : f32 to vector<8x1024xf32>
    %10 = arith.mulf %9, %6 : vector<8x1024xf32>
    %11 = arith.select %8, %6, %10 : vector<8x1024xi1>, vector<8x1024xf32>
    %12 = arith.truncf %11 : vector<8x1024xf32> to vector<8x1024xbf16>
    %c0_7 = arith.constant 0 : index
    %c0_8 = arith.constant 0 : index
    %13 = vector.load %arg4[%c0_7, %c0_8] : memref<1024x512xbf16, #tpu.memory_space<vmem>>, vector<1024x512xbf16>
    %cst_9 = arith.constant dense<0.000000e+00> : vector<8x512xf32>
    %14 = tpu.matmul %12, %13, %cst_9 {dimension_numbers = #tpu.dot_dimension_numbers<[1], [0], [0], [1], [0, 0, 1, 1], [], []>} : vector<8x1024xbf16>, vector<1024x512xbf16>, vector<8x512xf32> -> vector<8x512xf32>
    %c0_10 = arith.constant 0 : index
    %c0_11 = arith.constant 0 : index
    %15 = vector.load %arg5[%c0_10, %c0_11] : memref<1x512xf32, #tpu.memory_space<vmem>>, vector<1x512xf32>
    %16 = vector.broadcast %15 : vector<1x512xf32> to vector<8x512xf32>
    %17 = arith.addf %14, %16 : vector<8x512xf32>
    %cst_12 = arith.constant 0.000000e+00 : f32
    %18 = vector.broadcast %cst_12 : f32 to vector<8x512xf32>
    %19 = arith.cmpf ogt, %17, %18 : vector<8x512xf32>
    %cst_13 = arith.constant 2.000000e-01 : f32
    %20 = vector.broadcast %cst_13 : f32 to vector<8x512xf32>
    %21 = arith.mulf %20, %17 : vector<8x512xf32>
    %22 = arith.select %19, %17, %21 : vector<8x512xi1>, vector<8x512xf32>
    %23 = arith.truncf %22 : vector<8x512xf32> to vector<8x512xbf16>
    %c0_14 = arith.constant 0 : index
    %c0_15 = arith.constant 0 : index
    %24 = vector.load %arg6[%c0_14, %c0_15] : memref<512x256xbf16, #tpu.memory_space<vmem>>, vector<512x256xbf16>
    %cst_16 = arith.constant dense<0.000000e+00> : vector<8x256xf32>
    %25 = tpu.matmul %23, %24, %cst_16 {dimension_numbers = #tpu.dot_dimension_numbers<[1], [0], [0], [1], [0, 0, 1, 1], [], []>} : vector<8x512xbf16>, vector<512x256xbf16>, vector<8x256xf32> -> vector<8x256xf32>
    %c0_17 = arith.constant 0 : index
    %c0_18 = arith.constant 0 : index
    %26 = vector.load %arg7[%c0_17, %c0_18] : memref<1x256xf32, #tpu.memory_space<vmem>>, vector<1x256xf32>
    %27 = vector.broadcast %26 : vector<1x256xf32> to vector<8x256xf32>
    %28 = arith.addf %25, %27 : vector<8x256xf32>
    %cst_19 = arith.constant 0.000000e+00 : f32
    %29 = vector.broadcast %cst_19 : f32 to vector<8x256xf32>
    %30 = arith.cmpf ogt, %28, %29 : vector<8x256xf32>
    %cst_20 = arith.constant 2.000000e-01 : f32
    %31 = vector.broadcast %cst_20 : f32 to vector<8x256xf32>
    %32 = arith.mulf %31, %28 : vector<8x256xf32>
    %33 = arith.select %30, %28, %32 : vector<8x256xi1>, vector<8x256xf32>
    %c0_21 = arith.constant 0 : index
    %c0_22 = arith.constant 0 : index
    %34 = vector.load %arg8[%c0_21, %c0_22] : memref<8x256xf32, #tpu.memory_space<vmem>>, vector<8x256xf32>
    %cst_23 = arith.constant dense<0.000000e+00> : vector<8x8xf32>
    %35 = tpu.matmul %34, %33, %cst_23 {dimension_numbers = #tpu.dot_dimension_numbers<[1], [1], [0], [0], [0, 0, 1, 0], [], []>} : vector<8x256xf32>, vector<8x256xf32>, vector<8x8xf32> -> vector<8x8xf32>
    %36 = vector.extract_strided_slice %35 {offsets = [0, 0], sizes = [1, 8], strides = [1, 1]} : vector<8x8xf32> to vector<1x8xf32>
    %c0_24 = arith.constant 0 : index
    %c0_25 = arith.constant 0 : index
    %37 = memref.load %arg9[%c0_24, %c0_25] : memref<1x1xf32, #tpu.memory_space<smem>>
    %38 = vector.broadcast %37 : f32 to vector<1x8xf32>
    %39 = arith.addf %36, %38 : vector<1x8xf32>
    %c0_26 = arith.constant 0 : index
    %c0_27 = arith.constant 0 : index
    %c0_28 = arith.constant 0 : index
    %40 = vector.load %arg10[%c0_26, %c0_27, %c0_28] : memref<1x1x8xf32, #tpu.memory_space<vmem>>, vector<1x1x8xf32>
    %41 = vector.shape_cast %40 : vector<1x1x8xf32> to vector<1x8xf32>
    %42 = vector.shape_cast %39 : vector<1x8xf32> to vector<1x1x8xf32>
    tpu.vector_store %arg10[%c0_26, %c0_27, %c0_28], %42 {strides = array<i32>} : memref<1x1x8xf32, #tpu.memory_space<vmem>>, vector<1x1x8xf32>,
    return
  }
  func.func @transform_0(%arg0: i32) -> (i32, i32) {
    %c0_i32 = arith.constant 0 : i32
    %c0_i32_0 = arith.constant 0 : i32
    return %arg0, %c0_i32 : i32, i32
  }
  func.func @transform_1(%arg0: i32) -> (i32, i32) {
    %c0_i32 = arith.constant 0 : i32
    %c0_i32_0 = arith.constant 0 : i32
    %c0_i32_1 = arith.constant 0 : i32
    return %c0_i32, %c0_i32_0 : i32, i32
  }
  func.func @transform_2(%arg0: i32) -> (i32, i32) {
    %c0_i32 = arith.constant 0 : i32
    %c0_i32_0 = arith.constant 0 : i32
    %c0_i32_1 = arith.constant 0 : i32
    return %c0_i32, %c0_i32_0 : i32, i32
  }
  func.func @transform_3(%arg0: i32) -> (i32, i32) {
    %c0_i32 = arith.constant 0 : i32
    %c0_i32_0 = arith.constant 0 : i32
    %c0_i32_1 = arith.constant 0 : i32
    return %c0_i32, %c0_i32_0 : i32, i32
  }
  func.func @transform_4(%arg0: i32) -> (i32, i32) {
    %c0_i32 = arith.constant 0 : i32
    %c0_i32_0 = arith.constant 0 : i32
    %c0_i32_1 = arith.constant 0 : i32
    return %c0_i32, %c0_i32_0 : i32, i32
  }
  func.func @transform_5(%arg0: i32) -> (i32, i32) {
    %c0_i32 = arith.constant 0 : i32
    %c0_i32_0 = arith.constant 0 : i32
    %c0_i32_1 = arith.constant 0 : i32
    return %c0_i32, %c0_i32_0 : i32, i32
  }
  func.func @transform_6(%arg0: i32) -> (i32, i32) {
    %c0_i32 = arith.constant 0 : i32
    %c0_i32_0 = arith.constant 0 : i32
    %c0_i32_1 = arith.constant 0 : i32
    return %c0_i32, %c0_i32_0 : i32, i32
  }
  func.func @transform_7(%arg0: i32) -> (i32, i32) {
    %c0_i32 = arith.constant 0 : i32
    %c0_i32_0 = arith.constant 0 : i32
    %c0_i32_1 = arith.constant 0 : i32
    return %c0_i32, %c0_i32_0 : i32, i32
  }
  func.func @transform_8(%arg0: i32) -> (i32, i32) {
    %c0_i32 = arith.constant 0 : i32
    %c0_i32_0 = arith.constant 0 : i32
    %c0_i32_1 = arith.constant 0 : i32
    return %c0_i32, %c0_i32_0 : i32, i32
  }
  func.func @transform_9(%arg0: i32) -> (i32, i32, i32) {
    %c0_i32 = arith.constant 0 : i32
    %c0_i32_0 = arith.constant 0 : i32
    %c0_i32_1 = arith.constant 0 : i32
    return %arg0, %c0_i32, %c0_i32_0 : i32, i32, i32
  }
}

</mosaic_0001>

<llo_original>
// kernel: discriminator_forward.1
$region0: #{discriminator_forward.1}
  #allocation0 [shape = 'u32[]', space=smem, size = 0x4, offset = 0x4, fixed_abs, tag = 'smem constant byte address 0x4 - core index']
  #allocation1 [shape = 'u32[144,128]{1,0:T(1,128)}', space=vmem, size = 0x12000, scoped, tag = 'internal scratch']
  #allocation2 [shape = 'f32[1,1]{1,0:T(1,128)S(6)}', space=smem, size = 0x200, scoped, tag = 'scoped memory for discriminator_forward.1']
  %s0 = inlined_call_operand.vmem [shape: f32[8,32], index: 0, kind: input, shape index: {}]
  %s1 = inlined_call_operand.vmem [shape: bf16[32,1024], index: 1, kind: input, shape index: {}]
  %s2 = inlined_call_operand.vmem [shape: f32[1,1024], index: 2, kind: input, shape index: {}]
  %s3 = inlined_call_operand.vmem [shape: bf16[1024,512], index: 3, kind: input, shape index: {}]
  %s4 = inlined_call_operand.vmem [shape: f32[1,512], index: 4, kind: input, shape index: {}]
  %s5 = inlined_call_operand.vmem [shape: bf16[512,256], index: 5, kind: input, shape index: {}]
  %s6 = inlined_call_operand.vmem [shape: f32[1,256], index: 6, kind: input, shape index: {}]
  %s7 = inlined_call_operand.vmem [shape: f32[8,256], index: 7, kind: input, shape index: {}]
  %s8 = inlined_call_operand.<no memory space> [shape: f32[1,1], index: 8, kind: input, shape index: {}]
  %s9 = inlined_call_operand.hbm [shape: f32[1,1,8], index: 9, kind: output, shape index: {}]
  %s10 = sld [smem:[#allocation0]]
  $region46: #{discriminator_forward.1} parent=0
    _
  %s12 = ssub.s32 1, %s10
  %s13 = scalar_select 0, %s12, %s10
  %14 = sst [smem:[#allocation2]] %s8
  $region1: #{discriminator_forward.1} parent=0
    #allocation3 [shape = 'u8[512]{0}', space=vmem, size = 0x400, scoped, tag = 'output window, operand 0, single buffered']
    #allocation4 [shape = 's32[1]{0}', space=sflag, size = 0x4, scoped, tag = 'scoped memory for discriminator_forward.1']
    %15 = vsyncpa [#allocation4], 0
    // Predicated region
    $region2: #{discriminator_forward.1} parent=1 // pred_check
      _
    $region3: #{discriminator_forward.1} parent=1 // pred_check_branch
      %17 = sbr.rel (0) target = $region5
    $region4: #{discriminator_forward.1} parent=1 // pred_region
      _
    $region5: #{discriminator_forward.1} parent=1 // pred_fallthru
      _
    // Predicated region
    $region6: #{discriminator_forward.1} parent=1 // pred_check
      _
    $region7: #{discriminator_forward.1} parent=1 // pred_check_branch
      %19 = sbr.rel (0) target = $region9
    $region8: #{discriminator_forward.1} parent=1 // pred_region
      _
    $region9: #{discriminator_forward.1} parent=1 // pred_fallthru
      _
    // Predicated region
    $region10: #{discriminator_forward.1} parent=1 // pred_check
      _
    $region11: #{discriminator_forward.1} parent=1 // pred_check_branch
      %21 = sbr.rel (0) target = $region13
    $region12: #{discriminator_forward.1} parent=1 // pred_region
      _
    $region13: #{discriminator_forward.1} parent=1 // pred_fallthru
      _
    // Predicated region
    $region14: #{discriminator_forward.1} parent=1 // pred_check
      _
    $region15: #{discriminator_forward.1} parent=1 // pred_check_branch
      %23 = sbr.rel (0) target = $region17
    $region16: #{discriminator_forward.1} parent=1 // pred_region
      _
    $region17: #{discriminator_forward.1} parent=1 // pred_fallthru
      _
    // Predicated region
    $region18: #{discriminator_forward.1} parent=1 // pred_check
      _
    $region19: #{discriminator_forward.1} parent=1 // pred_check_branch
      %25 = sbr.rel (0) target = $region21
    $region20: #{discriminator_forward.1} parent=1 // pred_region
      _
    $region21: #{discriminator_forward.1} parent=1 // pred_fallthru
      _
    // Predicated region
    $region22: #{discriminator_forward.1} parent=1 // pred_check
      _
    $region23: #{discriminator_forward.1} parent=1 // pred_check_branch
      %27 = sbr.rel (0) target = $region25
    $region24: #{discriminator_forward.1} parent=1 // pred_region
      _
    $region25: #{discriminator_forward.1} parent=1 // pred_fallthru
      _
    // Predicated region
    $region26: #{discriminator_forward.1} parent=1 // pred_check
      _
    $region27: #{discriminator_forward.1} parent=1 // pred_check_branch
      %29 = sbr.rel (0) target = $region29
    $region28: #{discriminator_forward.1} parent=1 // pred_region
      _
    $region29: #{discriminator_forward.1} parent=1 // pred_fallthru
      _
    // Predicated region
    $region30: #{discriminator_forward.1} parent=1 // pred_check
      _
    $region31: #{discriminator_forward.1} parent=1 // pred_check_branch
      %31 = sbr.rel (0) target = $region33
    $region32: #{discriminator_forward.1} parent=1 // pred_region
      _
    $region33: #{discriminator_forward.1} parent=1 // pred_fallthru
      _
    // Predicated region
    $region34: #{discriminator_forward.1} parent=1 // pred_check
      _
    $region35: #{discriminator_forward.1} parent=1 // pred_check_branch
      %33 = sbr.rel (0) target = $region37
    $region36: #{discriminator_forward.1} parent=1 // pred_region
      _
    $region37: #{discriminator_forward.1} parent=1 // pred_fallthru
      _
    %v35 = vld [vmem:[%s0] sm:$0xff]
    %v36 = vpack.c.bf16 %v35, %v35
    %v37 = vld [vmem:[%s1] sm:$0xff]
    %v38 = vld [vmem:[%s1 + $0x8] sm:$0xff]
    %v39 = vld [vmem:[%s1 + $0x10] sm:$0xff]
    %v40 = vld [vmem:[%s1 + $0x18] sm:$0xff]
    %v41 = vld [vmem:[%s1 + $0x20] sm:$0xff]
    %v42 = vld [vmem:[%s1 + $0x28] sm:$0xff]
    %v43 = vld [vmem:[%s1 + $0x30] sm:$0xff]
    %v44 = vld [vmem:[%s1 + $0x38] sm:$0xff]
    %v45 = vld [vmem:[%s1 + $0x40] sm:$0xff]
    %v46 = vld [vmem:[%s1 + $0x48] sm:$0xff]
    %v47 = vld [vmem:[%s1 + $0x50] sm:$0xff]
    %v48 = vld [vmem:[%s1 + $0x58] sm:$0xff]
    %v49 = vld [vmem:[%s1 + $0x60] sm:$0xff]
    %v50 = vld [vmem:[%s1 + $0x68] sm:$0xff]
    %v51 = vld [vmem:[%s1 + $0x70] sm:$0xff]
    %v52 = vld [vmem:[%s1 + $0x78] sm:$0xff]
    %v53 = vld [vmem:[%s2] sm:$0xff]
    %v55 = vlaneseq
    %v56 = vshrl.u32 %v55, 7
    %v57 = vsub.s32 0, %v56
    %v58 = vrot.slane %v53, %v57
    %v59 = vlaneseq
    %v60 = vshrl.u32 %v59, 7
    %v61 = vsub.s32 1, %v60
    %v62 = vrot.slane %v53, %v61
    %v63 = vlaneseq
    %v64 = vshrl.u32 %v63, 7
    %v65 = vsub.s32 2, %v64
    %v66 = vrot.slane %v53, %v65
    %v67 = vlaneseq
    %v68 = vshrl.u32 %v67, 7
    %v69 = vsub.s32 3, %v68
    %v70 = vrot.slane %v53, %v69
    %v71 = vlaneseq
    %v72 = vshrl.u32 %v71, 7
    %v73 = vsub.s32 4, %v72
    %v74 = vrot.slane %v53, %v73
    %v75 = vlaneseq
    %v76 = vshrl.u32 %v75, 7
    %v77 = vsub.s32 5, %v76
    %v78 = vrot.slane %v53, %v77
    %v79 = vlaneseq
    %v80 = vshrl.u32 %v79, 7
    %v81 = vsub.s32 6, %v80
    %v82 = vrot.slane %v53, %v81
    %v83 = vlaneseq
    %v84 = vshrl.u32 %v83, 7
    %v85 = vsub.s32 7, %v84
    %v86 = vrot.slane %v53, %v85
    %v111 = vunpack.c.l.b16 %v37
    %v112 = vunpack.c.h.b16 %v37
    %v113 = vunpack.c.l.b16 %v38
    %v114 = vunpack.c.h.b16 %v38
    %v115 = vunpack.c.l.b16 %v39
    %v116 = vunpack.c.h.b16 %v39
    %v117 = vunpack.c.l.b16 %v40
    %v118 = vunpack.c.h.b16 %v40
    %v119 = vunpack.c.l.b16 %v41
    %v120 = vunpack.c.h.b16 %v41
    %v121 = vunpack.c.l.b16 %v42
    %v122 = vunpack.c.h.b16 %v42
    %v123 = vunpack.c.l.b16 %v43
    %v124 = vunpack.c.h.b16 %v43
    %v125 = vunpack.c.l.b16 %v44
    %v126 = vunpack.c.h.b16 %v44
    %v127 = vunpack.c.l.b16 %v45
    %v128 = vunpack.c.h.b16 %v45
    %v129 = vunpack.c.l.b16 %v46
    %v130 = vunpack.c.h.b16 %v46
    %v131 = vunpack.c.l.b16 %v47
    %v132 = vunpack.c.h.b16 %v47
    %v133 = vunpack.c.l.b16 %v48
    %v134 = vunpack.c.h.b16 %v48
    %v135 = vunpack.c.l.b16 %v49
    %v136 = vunpack.c.h.b16 %v49
    %v137 = vunpack.c.l.b16 %v50
    %v138 = vunpack.c.h.b16 %v50
    %v139 = vunpack.c.l.b16 %v51
    %v140 = vunpack.c.h.b16 %v51
    %v141 = vunpack.c.l.b16 %v52
    %v142 = vunpack.c.h.b16 %v52
    %v143 = vpack.c.b16 %v119, %v111
    %v144 = vpack.c.b16 %v120, %v112
    %v145 = vpack.c.b16 %v121, %v113
    %v146 = vpack.c.b16 %v122, %v114
    %v147 = vpack.c.b16 %v123, %v115
    %v148 = vpack.c.b16 %v124, %v116
    %v149 = vpack.c.b16 %v125, %v117
    %v150 = vpack.c.b16 %v126, %v118
    %v151 = vpack.c.b16 %v135, %v127
    %v152 = vpack.c.b16 %v136, %v128
    %v153 = vpack.c.b16 %v137, %v129
    %v154 = vpack.c.b16 %v138, %v130
    %v155 = vpack.c.b16 %v139, %v131
    %v156 = vpack.c.b16 %v140, %v132
    %v157 = vpack.c.b16 %v141, %v133
    %v158 = vpack.c.b16 %v142, %v134
    %vm175 = vcmask 261120
    %v177 = vsel %vm175, %v36, 0
    %179 = vmatprep.subr.bf16.mxu0 0
    %180 = vmatpush1.bf16.msra.mxu0 0
    %181 = vmatprep.subr.bf16.mxu0 0
    %182 = vmatpush1.bf16.msra.mxu0 0
    %183 = vmatprep.subr.bf16.mxu0 0
    %184 = vmatpush1.bf16.msra.mxu0 0
    %185 = vmatprep.subr.bf16.mxu0 0
    %186 = vmatpush1.bf16.msra.mxu0 0
    %187 = vmatprep.subr.bf16.mxu0 0
    %188 = vmatpush1.bf16.msra.mxu0 0
    %189 = vmatprep.subr.bf16.mxu0 0
    %190 = vmatpush1.bf16.msra.mxu0 0
    %191 = vmatprep.subr.bf16.mxu0 %v152
    %192 = vmatpush1.bf16.msra.mxu0 %v151
    %193 = vmatprep.subr.bf16.mxu0 %v144
    %194 = vmatpush1.bf16.msra.mxu0 %v143
    %195 = vmatprep.subr.bf16.mxu0 0
    %196 = vmatpush2.bf16.msra.mxu0 0
    %197 = vmatprep.subr.bf16.mxu0 0
    %198 = vmatpush2.bf16.msra.mxu0 0
    %199 = vmatprep.subr.bf16.mxu0 0
    %200 = vmatpush2.bf16.msra.mxu0 0
    %201 = vmatprep.subr.bf16.mxu0 0
    %202 = vmatpush2.bf16.msra.mxu0 0
    %203 = vmatprep.subr.bf16.mxu0 0
    %204 = vmatpush2.bf16.msra.mxu0 0
    %205 = vmatprep.subr.bf16.mxu0 0
    %206 = vmatpush2.bf16.msra.mxu0 0
    %207 = vmatprep.subr.bf16.mxu0 0
    %208 = vmatpush2.bf16.msra.mxu0 0
    %209 = vmatprep.subr.bf16.mxu0 0
    %210 = vmatpush2.bf16.msra.mxu0 0
    %211 = vmatprep.mubr.bf16.mxu0 0
    %212 = vmatmul.mubr.bf16.gmra.mxu0 %v177
    %v213 = vpop.f32.mrf.mxu0
    %v214 = vadd.f32 %v58, %v213
    %v215 = vpop.f32.mrf.mxu0
    %v216 = vadd.f32 %v62, %v215
    %v217 = vpop.f32.mrf.mxu0
    %v218 = vpop.f32.mrf.mxu0
    %219 = vdwg.mxu0
    %220 = vmatprep.subr.bf16.mxu0 0
    %221 = vmatpush1.bf16.msra.mxu0 0
    %222 = vmatprep.subr.bf16.mxu0 0
    %223 = vmatpush1.bf16.msra.mxu0 0
    %224 = vmatprep.subr.bf16.mxu0 0
    %225 = vmatpush1.bf16.msra.mxu0 0
    %226 = vmatprep.subr.bf16.mxu0 0
    %227 = vmatpush1.bf16.msra.mxu0 0
    %228 = vmatprep.subr.bf16.mxu0 0
    %229 = vmatpush1.bf16.msra.mxu0 0
    %230 = vmatprep.subr.bf16.mxu0 0
    %231 = vmatpush1.bf16.msra.mxu0 0
    %232 = vmatprep.subr.bf16.mxu0 %v154
    %233 = vmatpush1.bf16.msra.mxu0 %v153
    %234 = vmatprep.subr.bf16.mxu0 %v146
    %235 = vmatpush1.bf16.msra.mxu0 %v145
    %236 = vmatprep.subr.bf16.mxu0 0
    %237 = vmatpush2.bf16.msra.mxu0 0
    %238 = vmatprep.subr.bf16.mxu0 0
    %239 = vmatpush2.bf16.msra.mxu0 0
    %240 = vmatprep.subr.bf16.mxu0 0
    %241 = vmatpush2.bf16.msra.mxu0 0
    %242 = vmatprep.subr.bf16.mxu0 0
    %243 = vmatpush2.bf16.msra.mxu0 0
    %244 = vmatprep.subr.bf16.mxu0 0
    %245 = vmatpush2.bf16.msra.mxu0 0
    %246 = vmatprep.subr.bf16.mxu0 0
    %247 = vmatpush2.bf16.msra.mxu0 0
    %248 = vmatprep.subr.bf16.mxu0 0
    %249 = vmatpush2.bf16.msra.mxu0 0
    %250 = vmatprep.subr.bf16.mxu0 0
    %251 = vmatpush2.bf16.msra.mxu0 0
    %252 = vmatprep.mubr.bf16.mxu0 0
    %253 = vmatmul.mubr.bf16.gmra.mxu0 %v177
    %v254 = vpop.f32.mrf.mxu0
    %v255 = vadd.f32 %v66, %v254
    %v256 = vpop.f32.mrf.mxu0
    %v257 = vadd.f32 %v70, %v256
    %v258 = vpop.f32.mrf.mxu0
    %v259 = vpop.f32.mrf.mxu0
    %260 = vdwg.mxu0
    %261 = vmatprep.subr.bf16.mxu0 0
    %262 = vmatpush1.bf16.msra.mxu0 0
    %263 = vmatprep.subr.bf16.mxu0 0
    %264 = vmatpush1.bf16.msra.mxu0 0
    %265 = vmatprep.subr.bf16.mxu0 0
    %266 = vmatpush1.bf16.msra.mxu0 0
    %267 = vmatprep.subr.bf16.mxu0 0
    %268 = vmatpush1.bf16.msra.mxu0 0
    %269 = vmatprep.subr.bf16.mxu0 0
    %270 = vmatpush1.bf16.msra.mxu0 0
    %271 = vmatprep.subr.bf16.mxu0 0
    %272 = vmatpush1.bf16.msra.mxu0 0
    %273 = vmatprep.subr.bf16.mxu0 %v156
    %274 = vmatpush1.bf16.msra.mxu0 %v155
    %275 = vmatprep.subr.bf16.mxu0 %v148
    %276 = vmatpush1.bf16.msra.mxu0 %v147
    %277 = vmatprep.subr.bf16.mxu0 0
    %278 = vmatpush2.bf16.msra.mxu0 0
    %279 = vmatprep.subr.bf16.mxu0 0
    %280 = vmatpush2.bf16.msra.mxu0 0
    %281 = vmatprep.subr.bf16.mxu0 0
    %282 = vmatpush2.bf16.msra.mxu0 0
    %283 = vmatprep.subr.bf16.mxu0 0
    %284 = vmatpush2.bf16.msra.mxu0 0
    %285 = vmatprep.subr.bf16.mxu0 0
    %286 = vmatpush2.bf16.msra.mxu0 0
    %287 = vmatprep.subr.bf16.mxu0 0
    %288 = vmatpush2.bf16.msra.mxu0 0
    %289 = vmatprep.subr.bf16.mxu0 0
    %290 = vmatpush2.bf16.msra.mxu0 0
    %291 = vmatprep.subr.bf16.mxu0 0
    %292 = vmatpush2.bf16.msra.mxu0 0
    %293 = vmatprep.mubr.bf16.mxu0 0
    %294 = vmatmul.mubr.bf16.gmra.mxu0 %v177
    %v295 = vpop.f32.mrf.mxu0
    %v296 = vadd.f32 %v74, %v295
    %v297 = vpop.f32.mrf.mxu0
    %v298 = vadd.f32 %v78, %v297
    %v299 = vpop.f32.mrf.mxu0
    %v300 = vpop.f32.mrf.mxu0
    %301 = vdwg.mxu0
    %302 = vmatprep.subr.bf16.mxu0 0
    %303 = vmatpush1.bf16.msra.mxu0 0
    %304 = vmatprep.subr.bf16.mxu0 0
    %305 = vmatpush1.bf16.msra.mxu0 0
    %306 = vmatprep.subr.bf16.mxu0 0
    %307 = vmatpush1.bf16.msra.mxu0 0
    %308 = vmatprep.subr.bf16.mxu0 0
    %309 = vmatpush1.bf16.msra.mxu0 0
    %310 = vmatprep.subr.bf16.mxu0 0
    %311 = vmatpush1.bf16.msra.mxu0 0
    %312 = vmatprep.subr.bf16.mxu0 0
    %313 = vmatpush1.bf16.msra.mxu0 0
    %314 = vmatprep.subr.bf16.mxu0 %v158
    %315 = vmatpush1.bf16.msra.mxu0 %v157
    %316 = vmatprep.subr.bf16.mxu0 %v150
    %317 = vmatpush1.bf16.msra.mxu0 %v149
    %318 = vmatprep.subr.bf16.mxu0 0
    %319 = vmatpush2.bf16.msra.mxu0 0
    %320 = vmatprep.subr.bf16.mxu0 0
    %321 = vmatpush2.bf16.msra.mxu0 0
    %322 = vmatprep.subr.bf16.mxu0 0
    %323 = vmatpush2.bf16.msra.mxu0 0
    %324 = vmatprep.subr.bf16.mxu0 0
    %325 = vmatpush2.bf16.msra.mxu0 0
    %326 = vmatprep.subr.bf16.mxu0 0
    %327 = vmatpush2.bf16.msra.mxu0 0
    %328 = vmatprep.subr.bf16.mxu0 0
    %329 = vmatpush2.bf16.msra.mxu0 0
    %330 = vmatprep.subr.bf16.mxu0 0
    %331 = vmatpush2.bf16.msra.mxu0 0
    %332 = vmatprep.subr.bf16.mxu0 0
    %333 = vmatpush2.bf16.msra.mxu0 0
    %334 = vmatprep.mubr.bf16.mxu0 0
    %335 = vmatmul.mubr.bf16.gmra.mxu0 %v177
    %v336 = vpop.f32.mrf.mxu0
    %v337 = vadd.f32 %v82, %v336
    %v338 = vpop.f32.mrf.mxu0
    %v339 = vadd.f32 %v86, %v338
    %v340 = vpop.f32.mrf.mxu0
    %v341 = vpop.f32.mrf.mxu0
    %342 = vdwg.mxu0
    %vm343 = vcmp.gt.f32.partialorder %v214, 0.0
    %vm344 = vcmp.gt.f32.partialorder %v216, 0.0
    %vm345 = vcmp.gt.f32.partialorder %v255, 0.0
    %vm346 = vcmp.gt.f32.partialorder %v257, 0.0
    %vm347 = vcmp.gt.f32.partialorder %v296, 0.0
    %vm348 = vcmp.gt.f32.partialorder %v298, 0.0
    %vm349 = vcmp.gt.f32.partialorder %v337, 0.0
    %vm350 = vcmp.gt.f32.partialorder %v339, 0.0
    %v351 = vmul.f32 %v214, 0.2
    %v352 = vmul.f32 %v216, 0.2
    %v353 = vmul.f32 %v255, 0.2
    %v354 = vmul.f32 %v257, 0.2
    %v355 = vmul.f32 %v296, 0.2
    %v356 = vmul.f32 %v298, 0.2
    %v357 = vmul.f32 %v337, 0.2
    %v358 = vmul.f32 %v339, 0.2
    %v359 = vsel %vm343, %v214, %v351
    %v360 = vsel %vm344, %v216, %v352
    %v361 = vsel %vm345, %v255, %v353
    %v362 = vsel %vm346, %v257, %v354
    %v363 = vsel %vm347, %v296, %v355
    %v364 = vsel %vm348, %v298, %v356
    %v365 = vsel %vm349, %v337, %v357
    %v366 = vsel %vm350, %v339, %v358
    %v367 = vpack.c.bf16 %v359, %v359
    %v368 = vpack.c.bf16 %v360, %v360
    %v369 = vpack.c.bf16 %v361, %v361
    %v370 = vpack.c.bf16 %v362, %v362
    %v371 = vpack.c.bf16 %v363, %v363
    %v372 = vpack.c.bf16 %v364, %v364
    %v373 = vpack.c.bf16 %v365, %v365
    %v374 = vpack.c.bf16 %v366, %v366
    %v375 = vld [vmem:[%s3] sm:$0xff]
    %v376 = vld [vmem:[%s3 + $0x8] sm:$0xff]
    %v377 = vld [vmem:[%s3 + $0x10] sm:$0xff]
    %v378 = vld [vmem:[%s3 + $0x18] sm:$0xff]
    %v379 = vld [vmem:[%s3 + $0x20] sm:$0xff]
    %v380 = vld [vmem:[%s3 + $0x28] sm:$0xff]
    %v381 = vld [vmem:[%s3 + $0x30] sm:$0xff]
    %v382 = vld [vmem:[%s3 + $0x38] sm:$0xff]
    %v383 = vld [vmem:[%s3 + $0x40] sm:$0xff]
    %v384 = vld [vmem:[%s3 + $0x48] sm:$0xff]
    %v385 = vld [vmem:[%s3 + $0x50] sm:$0xff]
    %v386 = vld [vmem:[%s3 + $0x58] sm:$0xff]
    %v387 = vld [vmem:[%s3 + $0x60] sm:$0xff]
    %v388 = vld [vmem:[%s3 + $0x68] sm:$0xff]
    %v389 = vld [vmem:[%s3 + $0x70] sm:$0xff]
    %v390 = vld [vmem:[%s3 + $0x78] sm:$0xff]
    %v391 = vld [vmem:[%s3 + $0x80] sm:$0xff]
    %v392 = vld [vmem:[%s3 + $0x88] sm:$0xff]
    %v393 = vld [vmem:[%s3 + $0x90] sm:$0xff]
    %v394 = vld [vmem:[%s3 + $0x98] sm:$0xff]
    %v395 = vld [vmem:[%s3 + $0xa0] sm:$0xff]
    %v396 = vld [vmem:[%s3 + $0xa8] sm:$0xff]
    %v397 = vld [vmem:[%s3 + $0xb0] sm:$0xff]
    %v398 = vld [vmem:[%s3 + $0xb8] sm:$0xff]
    %v399 = vld [vmem:[%s3 + $0xc0] sm:$0xff]
    %v400 = vld [vmem:[%s3 + $0xc8] sm:$0xff]
    %v401 = vld [vmem:[%s3 + $0xd0] sm:$0xff]
    %v402 = vld [vmem:[%s3 + $0xd8] sm:$0xff]
    %v403 = vld [vmem:[%s3 + $0xe0] sm:$0xff]
    %v404 = vld [vmem:[%s3 + $0xe8] sm:$0xff]
    %v405 = vld [vmem:[%s3 + $0xf0] sm:$0xff]
    %v406 = vld [vmem:[%s3 + $0xf8] sm:$0xff]
    %v407 = vld [vmem:[%s3 + $0x100] sm:$0xff]
    %v408 = vld [vmem:[%s3 + $0x108] sm:$0xff]
    %v409 = vld [vmem:[%s3 + $0x110] sm:$0xff]
    %v410 = vld [vmem:[%s3 + $0x118] sm:$0xff]
    %v411 = vld [vmem:[%s3 + $0x120] sm:$0xff]
    %v412 = vld [vmem:[%s3 + $0x128] sm:$0xff]
    %v413 = vld [vmem:[%s3 + $0x130] sm:$0xff]
    %v414 = vld [vmem:[%s3 + $0x138] sm:$0xff]
    %v415 = vld [vmem:[%s3 + $0x140] sm:$0xff]
    %v416 = vld [vmem:[%s3 + $0x148] sm:$0xff]
    %v417 = vld [vmem:[%s3 + $0x150] sm:$0xff]
    %v418 = vld [vmem:[%s3 + $0x158] sm:$0xff]
    %v419 = vld [vmem:[%s3 + $0x160] sm:$0xff]
    %v420 = vld [vmem:[%s3 + $0x168] sm:$0xff]
    %v421 = vld [vmem:[%s3 + $0x170] sm:$0xff]
    %v422 = vld [vmem:[%s3 + $0x178] sm:$0xff]
    %v423 = vld [vmem:[%s3 + $0x180] sm:$0xff]
    %v424 = vld [vmem:[%s3 + $0x188] sm:$0xff]
    %v425 = vld [vmem:[%s3 + $0x190] sm:$0xff]
    %v426 = vld [vmem:[%s3 + $0x198] sm:$0xff]
    %v427 = vld [vmem:[%s3 + $0x1a0] sm:$0xff]
    %v428 = vld [vmem:[%s3 + $0x1a8] sm:$0xff]
    %v429 = vld [vmem:[%s3 + $0x1b0] sm:$0xff]
    %v430 = vld [vmem:[%s3 + $0x1b8] sm:$0xff]
    %v431 = vld [vmem:[%s3 + $0x1c0] sm:$0xff]
    %v432 = vld [vmem:[%s3 + $0x1c8] sm:$0xff]
    %v433 = vld [vmem:[%s3 + $0x1d0] sm:$0xff]
    %v434 = vld [vmem:[%s3 + $0x1d8] sm:$0xff]
    %v435 = vld [vmem:[%s3 + $0x1e0] sm:$0xff]
    %v436 = vld [vmem:[%s3 + $0x1e8] sm:$0xff]
    %v437 = vld [vmem:[%s3 + $0x1f0] sm:$0xff]
    %v438 = vld [vmem:[%s3 + $0x1f8] sm:$0xff]
    %v439 = vld [vmem:[%s3 + $0x200] sm:$0xff]
    %v440 = vld [vmem:[%s3 + $0x208] sm:$0xff]
    %v441 = vld [vmem:[%s3 + $0x210] sm:$0xff]
    %v442 = vld [vmem:[%s3 + $0x218] sm:$0xff]
    %v443 = vld [vmem:[%s3 + $0x220] sm:$0xff]
    %v444 = vld [vmem:[%s3 + $0x228] sm:$0xff]
    %v445 = vld [vmem:[%s3 + $0x230] sm:$0xff]
    %v446 = vld [vmem:[%s3 + $0x238] sm:$0xff]
    %v447 = vld [vmem:[%s3 + $0x240] sm:$0xff]
    %v448 = vld [vmem:[%s3 + $0x248] sm:$0xff]
    %v449 = vld [vmem:[%s3 + $0x250] sm:$0xff]
    %v450 = vld [vmem:[%s3 + $0x258] sm:$0xff]
    %v451 = vld [vmem:[%s3 + $0x260] sm:$0xff]
    %v452 = vld [vmem:[%s3 + $0x268] sm:$0xff]
    %v453 = vld [vmem:[%s3 + $0x270] sm:$0xff]
    %v454 = vld [vmem:[%s3 + $0x278] sm:$0xff]
    %v455 = vld [vmem:[%s3 + $0x280] sm:$0xff]
    %v456 = vld [vmem:[%s3 + $0x288] sm:$0xff]
    %v457 = vld [vmem:[%s3 + $0x290] sm:$0xff]
    %v458 = vld [vmem:[%s3 + $0x298] sm:$0xff]
    %v459 = vld [vmem:[%s3 + $0x2a0] sm:$0xff]
    %v460 = vld [vmem:[%s3 + $0x2a8] sm:$0xff]
    %v461 = vld [vmem:[%s3 + $0x2b0] sm:$0xff]
    %v462 = vld [vmem:[%s3 + $0x2b8] sm:$0xff]
    %v463 = vld [vmem:[%s3 + $0x2c0] sm:$0xff]
    %v464 = vld [vmem:[%s3 + $0x2c8] sm:$0xff]
    %v465 = vld [vmem:[%s3 + $0x2d0] sm:$0xff]
    %v466 = vld [vmem:[%s3 + $0x2d8] sm:$0xff]
    %v467 = vld [vmem:[%s3 + $0x2e0] sm:$0xff]
    %v468 = vld [vmem:[%s3 + $0x2e8] sm:$0xff]
    %v469 = vld [vmem:[%s3 + $0x2f0] sm:$0xff]
    %v470 = vld [vmem:[%s3 + $0x2f8] sm:$0xff]
    %v471 = vld [vmem:[%s3 + $0x300] sm:$0xff]
    %v472 = vld [vmem:[%s3 + $0x308] sm:$0xff]
    %v473 = vld [vmem:[%s3 + $0x310] sm:$0xff]
    %v474 = vld [vmem:[%s3 + $0x318] sm:$0xff]
    %v475 = vld [vmem:[%s3 + $0x320] sm:$0xff]
    %v476 = vld [vmem:[%s3 + $0x328] sm:$0xff]
    %v477 = vld [vmem:[%s3 + $0x330] sm:$0xff]
    %v478 = vld [vmem:[%s3 + $0x338] sm:$0xff]
    %v479 = vld [vmem:[%s3 + $0x340] sm:$0xff]
    %v480 = vld [vmem:[%s3 + $0x348] sm:$0xff]
    %v481 = vld [vmem:[%s3 + $0x350] sm:$0xff]
    %v482 = vld [vmem:[%s3 + $0x358] sm:$0xff]
    %v483 = vld [vmem:[%s3 + $0x360] sm:$0xff]
    %v484 = vld [vmem:[%s3 + $0x368] sm:$0xff]
    %v485 = vld [vmem:[%s3 + $0x370] sm:$0xff]
    %v486 = vld [vmem:[%s3 + $0x378] sm:$0xff]
    %v487 = vld [vmem:[%s3 + $0x380] sm:$0xff]
    %v488 = vld [vmem:[%s3 + $0x388] sm:$0xff]
    %v489 = vld [vmem:[%s3 + $0x390] sm:$0xff]
    %v490 = vld [vmem:[%s3 + $0x398] sm:$0xff]
    %v491 = vld [vmem:[%s3 + $0x3a0] sm:$0xff]
    %v492 = vld [vmem:[%s3 + $0x3a8] sm:$0xff]
    %v493 = vld [vmem:[%s3 + $0x3b0] sm:$0xff]
    %v494 = vld [vmem:[%s3 + $0x3b8] sm:$0xff]
    %v495 = vld [vmem:[%s3 + $0x3c0] sm:$0xff]
    %v496 = vld [vmem:[%s3 + $0x3c8] sm:$0xff]
    %v497 = vld [vmem:[%s3 + $0x3d0] sm:$0xff]
    %v498 = vld [vmem:[%s3 + $0x3d8] sm:$0xff]
    %v499 = vld [vmem:[%s3 + $0x3e0] sm:$0xff]
    %v500 = vld [vmem:[%s3 + $0x3e8] sm:$0xff]
    %v501 = vld [vmem:[%s3 + $0x3f0] sm:$0xff]
    %v502 = vld [vmem:[%s3 + $0x3f8] sm:$0xff]
    %v503 = vld [vmem:[%s3 + $0x400] sm:$0xff]
    %v504 = vld [vmem:[%s3 + $0x408] sm:$0xff]
    %v505 = vld [vmem:[%s3 + $0x410] sm:$0xff]
    %v506 = vld [vmem:[%s3 + $0x418] sm:$0xff]
    %v507 = vld [vmem:[%s3 + $0x420] sm:$0xff]
    %v508 = vld [vmem:[%s3 + $0x428] sm:$0xff]
    %v509 = vld [vmem:[%s3 + $0x430] sm:$0xff]
    %v510 = vld [vmem:[%s3 + $0x438] sm:$0xff]
    %v511 = vld [vmem:[%s3 + $0x440] sm:$0xff]
    %v512 = vld [vmem:[%s3 + $0x448] sm:$0xff]
    %v513 = vld [vmem:[%s3 + $0x450] sm:$0xff]
    %v514 = vld [vmem:[%s3 + $0x458] sm:$0xff]
    %v515 = vld [vmem:[%s3 + $0x460] sm:$0xff]
    %v516 = vld [vmem:[%s3 + $0x468] sm:$0xff]
    %v517 = vld [vmem:[%s3 + $0x470] sm:$0xff]
    %v518 = vld [vmem:[%s3 + $0x478] sm:$0xff]
    %v519 = vld [vmem:[%s3 + $0x480] sm:$0xff]
    %v520 = vld [vmem:[%s3 + $0x488] sm:$0xff]
    %v521 = vld [vmem:[%s3 + $0x490] sm:$0xff]
    %v522 = vld [vmem:[%s3 + $0x498] sm:$0xff]
    %v523 = vld [vmem:[%s3 + $0x4a0] sm:$0xff]
    %v524 = vld [vmem:[%s3 + $0x4a8] sm:$0xff]
    %v525 = vld [vmem:[%s3 + $0x4b0] sm:$0xff]
    %v526 = vld [vmem:[%s3 + $0x4b8] sm:$0xff]
    %v527 = vld [vmem:[%s3 + $0x4c0] sm:$0xff]
    %v528 = vld [vmem:[%s3 + $0x4c8] sm:$0xff]
    %v529 = vld [vmem:[%s3 + $0x4d0] sm:$0xff]
    %v530 = vld [vmem:[%s3 + $0x4d8] sm:$0xff]
    %v531 = vld [vmem:[%s3 + $0x4e0] sm:$0xff]
    %v532 = vld [vmem:[%s3 + $0x4e8] sm:$0xff]
    %v533 = vld [vmem:[%s3 + $0x4f0] sm:$0xff]
    %v534 = vld [vmem:[%s3 + $0x4f8] sm:$0xff]
    %v535 = vld [vmem:[%s3 + $0x500] sm:$0xff]
    %v536 = vld [vmem:[%s3 + $0x508] sm:$0xff]
    %v537 = vld [vmem:[%s3 + $0x510] sm:$0xff]
    %v538 = vld [vmem:[%s3 + $0x518] sm:$0xff]
    %v539 = vld [vmem:[%s3 + $0x520] sm:$0xff]
    %v540 = vld [vmem:[%s3 + $0x528] sm:$0xff]
    %v541 = vld [vmem:[%s3 + $0x530] sm:$0xff]
    %v542 = vld [vmem:[%s3 + $0x538] sm:$0xff]
    %v543 = vld [vmem:[%s3 + $0x540] sm:$0xff]
    %v544 = vld [vmem:[%s3 + $0x548] sm:$0xff]
    %v545 = vld [vmem:[%s3 + $0x550] sm:$0xff]
    %v546 = vld [vmem:[%s3 + $0x558] sm:$0xff]
    %v547 = vld [vmem:[%s3 + $0x560] sm:$0xff]
    %v548 = vld [vmem:[%s3 + $0x568] sm:$0xff]
    %v549 = vld [vmem:[%s3 + $0x570] sm:$0xff]
    %v550 = vld [vmem:[%s3 + $0x578] sm:$0xff]
    %v551 = vld [vmem:[%s3 + $0x580] sm:$0xff]
    %v552 = vld [vmem:[%s3 + $0x588] sm:$0xff]
    %v553 = vld [vmem:[%s3 + $0x590] sm:$0xff]
    %v554 = vld [vmem:[%s3 + $0x598] sm:$0xff]
    %v555 = vld [vmem:[%s3 + $0x5a0] sm:$0xff]
    %v556 = vld [vmem:[%s3 + $0x5a8] sm:$0xff]
    %v557 = vld [vmem:[%s3 + $0x5b0] sm:$0xff]
    %v558 = vld [vmem:[%s3 + $0x5b8] sm:$0xff]
    %v559 = vld [vmem:[%s3 + $0x5c0] sm:$0xff]
    %v560 = vld [vmem:[%s3 + $0x5c8] sm:$0xff]
    %v561 = vld [vmem:[%s3 + $0x5d0] sm:$0xff]
    %v562 = vld [vmem:[%s3 + $0x5d8] sm:$0xff]
    %v563 = vld [vmem:[%s3 + $0x5e0] sm:$0xff]
    %v564 = vld [vmem:[%s3 + $0x5e8] sm:$0xff]
    %v565 = vld [vmem:[%s3 + $0x5f0] sm:$0xff]
    %v566 = vld [vmem:[%s3 + $0x5f8] sm:$0xff]
    %v567 = vld [vmem:[%s3 + $0x600] sm:$0xff]
    %v568 = vld [vmem:[%s3 + $0x608] sm:$0xff]
    %v569 = vld [vmem:[%s3 + $0x610] sm:$0xff]
    %v570 = vld [vmem:[%s3 + $0x618] sm:$0xff]
    %v571 = vld [vmem:[%s3 + $0x620] sm:$0xff]
    %v572 = vld [vmem:[%s3 + $0x628] sm:$0xff]
    %v573 = vld [vmem:[%s3 + $0x630] sm:$0xff]
    %v574 = vld [vmem:[%s3 + $0x638] sm:$0xff]
    %v575 = vld [vmem:[%s3 + $0x640] sm:$0xff]
    %v576 = vld [vmem:[%s3 + $0x648] sm:$0xff]
    %v577 = vld [vmem:[%s3 + $0x650] sm:$0xff]
    %v578 = vld [vmem:[%s3 + $0x658] sm:$0xff]
    %v579 = vld [vmem:[%s3 + $0x660] sm:$0xff]
    %v580 = vld [vmem:[%s3 + $0x668] sm:$0xff]
    %v581 = vld [vmem:[%s3 + $0x670] sm:$0xff]
    %v582 = vld [vmem:[%s3 + $0x678] sm:$0xff]
    %v583 = vld [vmem:[%s3 + $0x680] sm:$0xff]
    %v584 = vld [vmem:[%s3 + $0x688] sm:$0xff]
    %v585 = vld [vmem:[%s3 + $0x690] sm:$0xff]
    %v586 = vld [vmem:[%s3 + $0x698] sm:$0xff]
    %v587 = vld [vmem:[%s3 + $0x6a0] sm:$0xff]
    %v588 = vld [vmem:[%s3 + $0x6a8] sm:$0xff]
    %v589 = vld [vmem:[%s3 + $0x6b0] sm:$0xff]
    %v590 = vld [vmem:[%s3 + $0x6b8] sm:$0xff]
    %v591 = vld [vmem:[%s3 + $0x6c0] sm:$0xff]
    %v592 = vld [vmem:[%s3 + $0x6c8] sm:$0xff]
    %v593 = vld [vmem:[%s3 + $0x6d0] sm:$0xff]
    %v594 = vld [vmem:[%s3 + $0x6d8] sm:$0xff]
    %v595 = vld [vmem:[%s3 + $0x6e0] sm:$0xff]
    %v596 = vld [vmem:[%s3 + $0x6e8] sm:$0xff]
    %v597 = vld [vmem:[%s3 + $0x6f0] sm:$0xff]
    %v598 = vld [vmem:[%s3 + $0x6f8] sm:$0xff]
    %v599 = vld [vmem:[%s3 + $0x700] sm:$0xff]
    %v600 = vld [vmem:[%s3 + $0x708] sm:$0xff]
    %v601 = vld [vmem:[%s3 + $0x710] sm:$0xff]
    %v602 = vld [vmem:[%s3 + $0x718] sm:$0xff]
    %v603 = vld [vmem:[%s3 + $0x720] sm:$0xff]
    %v604 = vld [vmem:[%s3 + $0x728] sm:$0xff]
    %v605 = vld [vmem:[%s3 + $0x730] sm:$0xff]
    %v606 = vld [vmem:[%s3 + $0x738] sm:$0xff]
    %v607 = vld [vmem:[%s3 + $0x740] sm:$0xff]
    %v608 = vld [vmem:[%s3 + $0x748] sm:$0xff]
    %v609 = vld [vmem:[%s3 + $0x750] sm:$0xff]
    %v610 = vld [vmem:[%s3 + $0x758] sm:$0xff]
    %v611 = vld [vmem:[%s3 + $0x760] sm:$0xff]
    %v612 = vld [vmem:[%s3 + $0x768] sm:$0xff]
    %v613 = vld [vmem:[%s3 + $0x770] sm:$0xff]
    %v614 = vld [vmem:[%s3 + $0x778] sm:$0xff]
    %v615 = vld [vmem:[%s3 + $0x780] sm:$0xff]
    %v616 = vld [vmem:[%s3 + $0x788] sm:$0xff]
    %v617 = vld [vmem:[%s3 + $0x790] sm:$0xff]
    %v618 = vld [vmem:[%s3 + $0x798] sm:$0xff]
    %v619 = vld [vmem:[%s3 + $0x7a0] sm:$0xff]
    %v620 = vld [vmem:[%s3 + $0x7a8] sm:$0xff]
    %v621 = vld [vmem:[%s3 + $0x7b0] sm:$0xff]
    %v622 = vld [vmem:[%s3 + $0x7b8] sm:$0xff]
    %v623 = vld [vmem:[%s3 + $0x7c0] sm:$0xff]
    %v624 = vld [vmem:[%s3 + $0x7c8] sm:$0xff]
    %v625 = vld [vmem:[%s3 + $0x7d0] sm:$0xff]
    %v626 = vld [vmem:[%s3 + $0x7d8] sm:$0xff]
    %v627 = vld [vmem:[%s3 + $0x7e0] sm:$0xff]
    %v628 = vld [vmem:[%s3 + $0x7e8] sm:$0xff]
    %v629 = vld [vmem:[%s3 + $0x7f0] sm:$0xff]
    %v630 = vld [vmem:[%s3 + $0x7f8] sm:$0xff]
    %v631 = vld [vmem:[%s4] sm:$0xf]
    %v633 = vlaneseq
    %v634 = vshrl.u32 %v633, 7
    %v635 = vsub.s32 0, %v634
    %v636 = vrot.slane %v631, %v635
    %v637 = vlaneseq
    %v638 = vshrl.u32 %v637, 7
    %v639 = vsub.s32 1, %v638
    %v640 = vrot.slane %v631, %v639
    %v641 = vlaneseq
    %v642 = vshrl.u32 %v641, 7
    %v643 = vsub.s32 2, %v642
    %v644 = vrot.slane %v631, %v643
    %v645 = vlaneseq
    %v646 = vshrl.u32 %v645, 7
    %v647 = vsub.s32 3, %v646
    %v648 = vrot.slane %v631, %v647
    %v909 = vunpack.c.l.b16 %v375
    %v910 = vunpack.c.h.b16 %v375
    %v911 = vunpack.c.l.b16 %v376
    %v912 = vunpack.c.h.b16 %v376
    %v913 = vunpack.c.l.b16 %v377
    %v914 = vunpack.c.h.b16 %v377
    %v915 = vunpack.c.l.b16 %v378
    %v916 = vunpack.c.h.b16 %v378
    %v917 = vunpack.c.l.b16 %v379
    %v918 = vunpack.c.h.b16 %v379
    %v919 = vunpack.c.l.b16 %v380
    %v920 = vunpack.c.h.b16 %v380
    %v921 = vunpack.c.l.b16 %v381
    %v922 = vunpack.c.h.b16 %v381
    %v923 = vunpack.c.l.b16 %v382
    %v924 = vunpack.c.h.b16 %v382
    %v925 = vunpack.c.l.b16 %v383
    %v926 = vunpack.c.h.b16 %v383
    %v927 = vunpack.c.l.b16 %v384
    %v928 = vunpack.c.h.b16 %v384
    %v929 = vunpack.c.l.b16 %v385
    %v930 = vunpack.c.h.b16 %v385
    %v931 = vunpack.c.l.b16 %v386
    %v932 = vunpack.c.h.b16 %v386
    %v933 = vunpack.c.l.b16 %v387
    %v934 = vunpack.c.h.b16 %v387
    %v935 = vunpack.c.l.b16 %v388
    %v936 = vunpack.c.h.b16 %v388
    %v937 = vunpack.c.l.b16 %v389
    %v938 = vunpack.c.h.b16 %v389
    %v939 = vunpack.c.l.b16 %v390
    %v940 = vunpack.c.h.b16 %v390
    %v941 = vunpack.c.l.b16 %v391
    %v942 = vunpack.c.h.b16 %v391
    %v943 = vunpack.c.l.b16 %v392
    %v944 = vunpack.c.h.b16 %v392
    %v945 = vunpack.c.l.b16 %v393
    %v946 = vunpack.c.h.b16 %v393
    %v947 = vunpack.c.l.b16 %v394
    %v948 = vunpack.c.h.b16 %v394
    %v949 = vunpack.c.l.b16 %v395
    %v950 = vunpack.c.h.b16 %v395
    %v951 = vunpack.c.l.b16 %v396
    %v952 = vunpack.c.h.b16 %v396
    %v953 = vunpack.c.l.b16 %v397
    %v954 = vunpack.c.h.b16 %v397
    %v955 = vunpack.c.l.b16 %v398
    %v956 = vunpack.c.h.b16 %v398
    %v957 = vunpack.c.l.b16 %v399
    %v958 = vunpack.c.h.b16 %v399
    %v959 = vunpack.c.l.b16 %v400
    %v960 = vunpack.c.h.b16 %v400
    %v961 = vunpack.c.l.b16 %v401
    %v962 = vunpack.c.h.b16 %v401
    %v963 = vunpack.c.l.b16 %v402
    %v964 = vunpack.c.h.b16 %v402
    %v965 = vunpack.c.l.b16 %v403
    %v966 = vunpack.c.h.b16 %v403
    %v967 = vunpack.c.l.b16 %v404
    %v968 = vunpack.c.h.b16 %v404
    %v969 = vunpack.c.l.b16 %v405
    %v970 = vunpack.c.h.b16 %v405
    %v971 = vunpack.c.l.b16 %v406
    %v972 = vunpack.c.h.b16 %v406
    %v973 = vunpack.c.l.b16 %v407
    %v974 = vunpack.c.h.b16 %v407
    %v975 = vunpack.c.l.b16 %v408
    %v976 = vunpack.c.h.b16 %v408
    %v977 = vunpack.c.l.b16 %v409
    %v978 = vunpack.c.h.b16 %v409
    %v979 = vunpack.c.l.b16 %v410
    %v980 = vunpack.c.h.b16 %v410
    %v981 = vunpack.c.l.b16 %v411
    %v982 = vunpack.c.h.b16 %v411
    %v983 = vunpack.c.l.b16 %v412
    %v984 = vunpack.c.h.b16 %v412
    %v985 = vunpack.c.l.b16 %v413
    %v986 = vunpack.c.h.b16 %v413
    %v987 = vunpack.c.l.b16 %v414
    %v988 = vunpack.c.h.b16 %v414
    %v989 = vunpack.c.l.b16 %v415
    %v990 = vunpack.c.h.b16 %v415
    %v991 = vunpack.c.l.b16 %v416
    %v992 = vunpack.c.h.b16 %v416
    %v993 = vunpack.c.l.b16 %v417
    %v994 = vunpack.c.h.b16 %v417
    %v995 = vunpack.c.l.b16 %v418
    %v996 = vunpack.c.h.b16 %v418
    %v997 = vunpack.c.l.b16 %v419
    %v998 = vunpack.c.h.b16 %v419
    %v999 = vunpack.c.l.b16 %v420
    %v1000 = vunpack.c.h.b16 %v420
    %v1001 = vunpack.c.l.b16 %v421
    %v1002 = vunpack.c.h.b16 %v421
    %v1003 = vunpack.c.l.b16 %v422
    %v1004 = vunpack.c.h.b16 %v422
    %v1005 = vunpack.c.l.b16 %v423
    %v1006 = vunpack.c.h.b16 %v423
    %v1007 = vunpack.c.l.b16 %v424
    %v1008 = vunpack.c.h.b16 %v424
    %v1009 = vunpack.c.l.b16 %v425
    %v1010 = vunpack.c.h.b16 %v425
    %v1011 = vunpack.c.l.b16 %v426
    %v1012 = vunpack.c.h.b16 %v426
    %v1013 = vunpack.c.l.b16 %v427
    %v1014 = vunpack.c.h.b16 %v427
    %v1015 = vunpack.c.l.b16 %v428
    %v1016 = vunpack.c.h.b16 %v428
    %v1017 = vunpack.c.l.b16 %v429
    %v1018 = vunpack.c.h.b16 %v429
    %v1019 = vunpack.c.l.b16 %v430
    %v1020 = vunpack.c.h.b16 %v430
    %v1021 = vunpack.c.l.b16 %v431
    %v1022 = vunpack.c.h.b16 %v431
    %v1023 = vunpack.c.l.b16 %v432
    %v1024 = vunpack.c.h.b16 %v432
    %v1025 = vunpack.c.l.b16 %v433
    %v1026 = vunpack.c.h.b16 %v433
    %v1027 = vunpack.c.l.b16 %v434
    %v1028 = vunpack.c.h.b16 %v434
    %v1029 = vunpack.c.l.b16 %v435
    %v1030 = vunpack.c.h.b16 %v435
    %v1031 = vunpack.c.l.b16 %v436
    %v1032 = vunpack.c.h.b16 %v436
    %v1033 = vunpack.c.l.b16 %v437
    %v1034 = vunpack.c.h.b16 %v437
    %v1035 = vunpack.c.l.b16 %v438
    %v1036 = vunpack.c.h.b16 %v438
    %v1037 = vunpack.c.l.b16 %v439
    %v1038 = vunpack.c.h.b16 %v439
    %v1039 = vunpack.c.l.b16 %v440
    %v1040 = vunpack.c.h.b16 %v440
    %v1041 = vunpack.c.l.b16 %v441
    %v1042 = vunpack.c.h.b16 %v441
    %v1043 = vunpack.c.l.b16 %v442
    %v1044 = vunpack.c.h.b16 %v442
    %v1045 = vunpack.c.l.b16 %v443
    %v1046 = vunpack.c.h.b16 %v443
    %v1047 = vunpack.c.l.b16 %v444
    %v1048 = vunpack.c.h.b16 %v444
    %v1049 = vunpack.c.l.b16 %v445
    %v1050 = vunpack.c.h.b16 %v445
    %v1051 = vunpack.c.l.b16 %v446
    %v1052 = vunpack.c.h.b16 %v446
    %v1053 = vunpack.c.l.b16 %v447
    %v1054 = vunpack.c.h.b16 %v447
    %v1055 = vunpack.c.l.b16 %v448
    %v1056 = vunpack.c.h.b16 %v448
    %v1057 = vunpack.c.l.b16 %v449
    %v1058 = vunpack.c.h.b16 %v449
    %v1059 = vunpack.c.l.b16 %v450
    %v1060 = vunpack.c.h.b16 %v450
    %v1061 = vunpack.c.l.b16 %v451
    %v1062 = vunpack.c.h.b16 %v451
    %v1063 = vunpack.c.l.b16 %v452
    %v1064 = vunpack.c.h.b16 %v452
    %v1065 = vunpack.c.l.b16 %v453
    %v1066 = vunpack.c.h.b16 %v453
    %v1067 = vunpack.c.l.b16 %v454
    %v1068 = vunpack.c.h.b16 %v454
    %v1069 = vunpack.c.l.b16 %v455
    %v1070 = vunpack.c.h.b16 %v455
    %v1071 = vunpack.c.l.b16 %v456
    %v1072 = vunpack.c.h.b16 %v456
    %v1073 = vunpack.c.l.b16 %v457
    %v1074 = vunpack.c.h.b16 %v457
    %v1075 = vunpack.c.l.b16 %v458
    %v1076 = vunpack.c.h.b16 %v458
    %v1077 = vunpack.c.l.b16 %v459
    %v1078 = vunpack.c.h.b16 %v459
    %v1079 = vunpack.c.l.b16 %v460
    %v1080 = vunpack.c.h.b16 %v460
    %v1081 = vunpack.c.l.b16 %v461
    %v1082 = vunpack.c.h.b16 %v461
    %v1083 = vunpack.c.l.b16 %v462
    %v1084 = vunpack.c.h.b16 %v462
    %v1085 = vunpack.c.l.b16 %v463
    %v1086 = vunpack.c.h.b16 %v463
    %v1087 = vunpack.c.l.b16 %v464
    %v1088 = vunpack.c.h.b16 %v464
    %v1089 = vunpack.c.l.b16 %v465
    %v1090 = vunpack.c.h.b16 %v465
    %v1091 = vunpack.c.l.b16 %v466
    %v1092 = vunpack.c.h.b16 %v466
    %v1093 = vunpack.c.l.b16 %v467
    %v1094 = vunpack.c.h.b16 %v467
    %v1095 = vunpack.c.l.b16 %v468
    %v1096 = vunpack.c.h.b16 %v468
    %v1097 = vunpack.c.l.b16 %v469
    %v1098 = vunpack.c.h.b16 %v469
    %v1099 = vunpack.c.l.b16 %v470
    %v1100 = vunpack.c.h.b16 %v470
    %v1101 = vunpack.c.l.b16 %v471
    %v1102 = vunpack.c.h.b16 %v471
    %v1103 = vunpack.c.l.b16 %v472
    %v1104 = vunpack.c.h.b16 %v472
    %v1105 = vunpack.c.l.b16 %v473
    %v1106 = vunpack.c.h.b16 %v473
    %v1107 = vunpack.c.l.b16 %v474
    %v1108 = vunpack.c.h.b16 %v474
    %v1109 = vunpack.c.l.b16 %v475
    %v1110 = vunpack.c.h.b16 %v475
    %v1111 = vunpack.c.l.b16 %v476
    %v1112 = vunpack.c.h.b16 %v476
    %v1113 = vunpack.c.l.b16 %v477
    %v1114 = vunpack.c.h.b16 %v477
    %v1115 = vunpack.c.l.b16 %v478
    %v1116 = vunpack.c.h.b16 %v478
    %v1117 = vunpack.c.l.b16 %v479
    %v1118 = vunpack.c.h.b16 %v479
    %v1119 = vunpack.c.l.b16 %v480
    %v1120 = vunpack.c.h.b16 %v480
    %v1121 = vunpack.c.l.b16 %v481
    %v1122 = vunpack.c.h.b16 %v481
    %v1123 = vunpack.c.l.b16 %v482
    %v1124 = vunpack.c.h.b16 %v482
    %v1125 = vunpack.c.l.b16 %v483
    %v1126 = vunpack.c.h.b16 %v483
    %v1127 = vunpack.c.l.b16 %v484
    %v1128 = vunpack.c.h.b16 %v484
    %v1129 = vunpack.c.l.b16 %v485
    %v1130 = vunpack.c.h.b16 %v485
    %v1131 = vunpack.c.l.b16 %v486
    %v1132 = vunpack.c.h.b16 %v486
    %v1133 = vunpack.c.l.b16 %v487
    %v1134 = vunpack.c.h.b16 %v487
    %v1135 = vunpack.c.l.b16 %v488
    %v1136 = vunpack.c.h.b16 %v488
    %v1137 = vunpack.c.l.b16 %v489
    %v1138 = vunpack.c.h.b16 %v489
    %v1139 = vunpack.c.l.b16 %v490
    %v1140 = vunpack.c.h.b16 %v490
    %v1141 = vunpack.c.l.b16 %v491
    %v1142 = vunpack.c.h.b16 %v491
    %v1143 = vunpack.c.l.b16 %v492
    %v1144 = vunpack.c.h.b16 %v492
    %v1145 = vunpack.c.l.b16 %v493
    %v1146 = vunpack.c.h.b16 %v493
    %v1147 = vunpack.c.l.b16 %v494
    %v1148 = vunpack.c.h.b16 %v494
    %v1149 = vunpack.c.l.b16 %v495
    %v1150 = vunpack.c.h.b16 %v495
    %v1151 = vunpack.c.l.b16 %v496
    %v1152 = vunpack.c.h.b16 %v496
    %v1153 = vunpack.c.l.b16 %v497
    %v1154 = vunpack.c.h.b16 %v497
    %v1155 = vunpack.c.l.b16 %v498
    %v1156 = vunpack.c.h.b16 %v498
    %v1157 = vunpack.c.l.b16 %v499
    %v1158 = vunpack.c.h.b16 %v499
    %v1159 = vunpack.c.l.b16 %v500
    %v1160 = vunpack.c.h.b16 %v500
    %v1161 = vunpack.c.l.b16 %v501
    %v1162 = vunpack.c.h.b16 %v501
    %v1163 = vunpack.c.l.b16 %v502
    %v1164 = vunpack.c.h.b16 %v502
    %v1165 = vunpack.c.l.b16 %v503
    %v1166 = vunpack.c.h.b16 %v503
    %v1167 = vunpack.c.l.b16 %v504
    %v1168 = vunpack.c.h.b16 %v504
    %v1169 = vunpack.c.l.b16 %v505
    %v1170 = vunpack.c.h.b16 %v505
    %v1171 = vunpack.c.l.b16 %v506
    %v1172 = vunpack.c.h.b16 %v506
    %v1173 = vunpack.c.l.b16 %v507
    %v1174 = vunpack.c.h.b16 %v507
    %v1175 = vunpack.c.l.b16 %v508
    %v1176 = vunpack.c.h.b16 %v508
    %v1177 = vunpack.c.l.b16 %v509
    %v1178 = vunpack.c.h.b16 %v509
    %v1179 = vunpack.c.l.b16 %v510
    %v1180 = vunpack.c.h.b16 %v510
    %v1181 = vunpack.c.l.b16 %v511
    %v1182 = vunpack.c.h.b16 %v511
    %v1183 = vunpack.c.l.b16 %v512
    %v1184 = vunpack.c.h.b16 %v512
    %v1185 = vunpack.c.l.b16 %v513
    %v1186 = vunpack.c.h.b16 %v513
    %v1187 = vunpack.c.l.b16 %v514
    %v1188 = vunpack.c.h.b16 %v514
    %v1189 = vunpack.c.l.b16 %v515
    %v1190 = vunpack.c.h.b16 %v515
    %v1191 = vunpack.c.l.b16 %v516
    %v1192 = vunpack.c.h.b16 %v516
    %v1193 = vunpack.c.l.b16 %v517
    %v1194 = vunpack.c.h.b16 %v517
    %v1195 = vunpack.c.l.b16 %v518
    %v1196 = vunpack.c.h.b16 %v518
    %v1197 = vunpack.c.l.b16 %v519
    %v1198 = vunpack.c.h.b16 %v519
    %v1199 = vunpack.c.l.b16 %v520
    %v1200 = vunpack.c.h.b16 %v520
    %v1201 = vunpack.c.l.b16 %v521
    %v1202 = vunpack.c.h.b16 %v521
    %v1203 = vunpack.c.l.b16 %v522
    %v1204 = vunpack.c.h.b16 %v522
    %v1205 = vunpack.c.l.b16 %v523
    %v1206 = vunpack.c.h.b16 %v523
    %v1207 = vunpack.c.l.b16 %v524
    %v1208 = vunpack.c.h.b16 %v524
    %v1209 = vunpack.c.l.b16 %v525
    %v1210 = vunpack.c.h.b16 %v525
    %v1211 = vunpack.c.l.b16 %v526
    %v1212 = vunpack.c.h.b16 %v526
    %v1213 = vunpack.c.l.b16 %v527
    %v1214 = vunpack.c.h.b16 %v527
    %v1215 = vunpack.c.l.b16 %v528
    %v1216 = vunpack.c.h.b16 %v528
    %v1217 = vunpack.c.l.b16 %v529
    %v1218 = vunpack.c.h.b16 %v529
    %v1219 = vunpack.c.l.b16 %v530
    %v1220 = vunpack.c.h.b16 %v530
    %v1221 = vunpack.c.l.b16 %v531
    %v1222 = vunpack.c.h.b16 %v531
    %v1223 = vunpack.c.l.b16 %v532
    %v1224 = vunpack.c.h.b16 %v532
    %v1225 = vunpack.c.l.b16 %v533
    %v1226 = vunpack.c.h.b16 %v533
    %v1227 = vunpack.c.l.b16 %v534
    %v1228 = vunpack.c.h.b16 %v534
    %v1229 = vunpack.c.l.b16 %v535
    %v1230 = vunpack.c.h.b16 %v535
    %v1231 = vunpack.c.l.b16 %v536
    %v1232 = vunpack.c.h.b16 %v536
    %v1233 = vunpack.c.l.b16 %v537
    %v1234 = vunpack.c.h.b16 %v537
    %v1235 = vunpack.c.l.b16 %v538
    %v1236 = vunpack.c.h.b16 %v538
    %v1237 = vunpack.c.l.b16 %v539
    %v1238 = vunpack.c.h.b16 %v539
    %v1239 = vunpack.c.l.b16 %v540
    %v1240 = vunpack.c.h.b16 %v540
    %v1241 = vunpack.c.l.b16 %v541
    %v1242 = vunpack.c.h.b16 %v541
    %v1243 = vunpack.c.l.b16 %v542
    %v1244 = vunpack.c.h.b16 %v542
    %v1245 = vunpack.c.l.b16 %v543
    %v1246 = vunpack.c.h.b16 %v543
    %v1247 = vunpack.c.l.b16 %v544
    %v1248 = vunpack.c.h.b16 %v544
    %v1249 = vunpack.c.l.b16 %v545
    %v1250 = vunpack.c.h.b16 %v545
    %v1251 = vunpack.c.l.b16 %v546
    %v1252 = vunpack.c.h.b16 %v546
    %v1253 = vunpack.c.l.b16 %v547
    %v1254 = vunpack.c.h.b16 %v547
    %v1255 = vunpack.c.l.b16 %v548
    %v1256 = vunpack.c.h.b16 %v548
    %v1257 = vunpack.c.l.b16 %v549
    %v1258 = vunpack.c.h.b16 %v549
    %v1259 = vunpack.c.l.b16 %v550
    %v1260 = vunpack.c.h.b16 %v550
    %v1261 = vunpack.c.l.b16 %v551
    %v1262 = vunpack.c.h.b16 %v551
    %v1263 = vunpack.c.l.b16 %v552
    %v1264 = vunpack.c.h.b16 %v552
    %v1265 = vunpack.c.l.b16 %v553
    %v1266 = vunpack.c.h.b16 %v553
    %v1267 = vunpack.c.l.b16 %v554
    %v1268 = vunpack.c.h.b16 %v554
    %v1269 = vunpack.c.l.b16 %v555
    %v1270 = vunpack.c.h.b16 %v555
    %v1271 = vunpack.c.l.b16 %v556
    %v1272 = vunpack.c.h.b16 %v556
    %v1273 = vunpack.c.l.b16 %v557
    %v1274 = vunpack.c.h.b16 %v557
    %v1275 = vunpack.c.l.b16 %v558
    %v1276 = vunpack.c.h.b16 %v558
    %v1277 = vunpack.c.l.b16 %v559
    %v1278 = vunpack.c.h.b16 %v559
    %v1279 = vunpack.c.l.b16 %v560
    %v1280 = vunpack.c.h.b16 %v560
    %v1281 = vunpack.c.l.b16 %v561
    %v1282 = vunpack.c.h.b16 %v561
    %v1283 = vunpack.c.l.b16 %v562
    %v1284 = vunpack.c.h.b16 %v562
    %v1285 = vunpack.c.l.b16 %v563
    %v1286 = vunpack.c.h.b16 %v563
    %v1287 = vunpack.c.l.b16 %v564
    %v1288 = vunpack.c.h.b16 %v564
    %v1289 = vunpack.c.l.b16 %v565
    %v1290 = vunpack.c.h.b16 %v565
    %v1291 = vunpack.c.l.b16 %v566
    %v1292 = vunpack.c.h.b16 %v566
    %v1293 = vunpack.c.l.b16 %v567
    %v1294 = vunpack.c.h.b16 %v567
    %v1295 = vunpack.c.l.b16 %v568
    %v1296 = vunpack.c.h.b16 %v568
    %v1297 = vunpack.c.l.b16 %v569
    %v1298 = vunpack.c.h.b16 %v569
    %v1299 = vunpack.c.l.b16 %v570
    %v1300 = vunpack.c.h.b16 %v570
    %v1301 = vunpack.c.l.b16 %v571
    %v1302 = vunpack.c.h.b16 %v571
    %v1303 = vunpack.c.l.b16 %v572
    %v1304 = vunpack.c.h.b16 %v572
    %v1305 = vunpack.c.l.b16 %v573
    %v1306 = vunpack.c.h.b16 %v573
    %v1307 = vunpack.c.l.b16 %v574
    %v1308 = vunpack.c.h.b16 %v574
    %v1309 = vunpack.c.l.b16 %v575
    %v1310 = vunpack.c.h.b16 %v575
    %v1311 = vunpack.c.l.b16 %v576
    %v1312 = vunpack.c.h.b16 %v576
    %v1313 = vunpack.c.l.b16 %v577
    %v1314 = vunpack.c.h.b16 %v577
    %v1315 = vunpack.c.l.b16 %v578
    %v1316 = vunpack.c.h.b16 %v578
    %v1317 = vunpack.c.l.b16 %v579
    %v1318 = vunpack.c.h.b16 %v579
    %v1319 = vunpack.c.l.b16 %v580
    %v1320 = vunpack.c.h.b16 %v580
    %v1321 = vunpack.c.l.b16 %v581
    %v1322 = vunpack.c.h.b16 %v581
    %v1323 = vunpack.c.l.b16 %v582
    %v1324 = vunpack.c.h.b16 %v582
    %v1325 = vunpack.c.l.b16 %v583
    %v1326 = vunpack.c.h.b16 %v583
    %v1327 = vunpack.c.l.b16 %v584
    %v1328 = vunpack.c.h.b16 %v584
    %v1329 = vunpack.c.l.b16 %v585
    %v1330 = vunpack.c.h.b16 %v585
    %v1331 = vunpack.c.l.b16 %v586
    %v1332 = vunpack.c.h.b16 %v586
    %v1333 = vunpack.c.l.b16 %v587
    %v1334 = vunpack.c.h.b16 %v587
    %v1335 = vunpack.c.l.b16 %v588
    %v1336 = vunpack.c.h.b16 %v588
    %v1337 = vunpack.c.l.b16 %v589
    %v1338 = vunpack.c.h.b16 %v589
    %v1339 = vunpack.c.l.b16 %v590
    %v1340 = vunpack.c.h.b16 %v590
    %v1341 = vunpack.c.l.b16 %v591
    %v1342 = vunpack.c.h.b16 %v591
    %v1343 = vunpack.c.l.b16 %v592
    %v1344 = vunpack.c.h.b16 %v592
    %v1345 = vunpack.c.l.b16 %v593
    %v1346 = vunpack.c.h.b16 %v593
    %v1347 = vunpack.c.l.b16 %v594
    %v1348 = vunpack.c.h.b16 %v594
    %v1349 = vunpack.c.l.b16 %v595
    %v1350 = vunpack.c.h.b16 %v595
    %v1351 = vunpack.c.l.b16 %v596
    %v1352 = vunpack.c.h.b16 %v596
    %v1353 = vunpack.c.l.b16 %v597
    %v1354 = vunpack.c.h.b16 %v597
    %v1355 = vunpack.c.l.b16 %v598
    %v1356 = vunpack.c.h.b16 %v598
    %v1357 = vunpack.c.l.b16 %v599
    %v1358 = vunpack.c.h.b16 %v599
    %v1359 = vunpack.c.l.b16 %v600
    %v1360 = vunpack.c.h.b16 %v600
    %v1361 = vunpack.c.l.b16 %v601
    %v1362 = vunpack.c.h.b16 %v601
    %v1363 = vunpack.c.l.b16 %v602
    %v1364 = vunpack.c.h.b16 %v602
    %v1365 = vunpack.c.l.b16 %v603
    %v1366 = vunpack.c.h.b16 %v603
    %v1367 = vunpack.c.l.b16 %v604
    %v1368 = vunpack.c.h.b16 %v604
    %v1369 = vunpack.c.l.b16 %v605
    %v1370 = vunpack.c.h.b16 %v605
    %v1371 = vunpack.c.l.b16 %v606
    %v1372 = vunpack.c.h.b16 %v606
    %v1373 = vunpack.c.l.b16 %v607
    %v1374 = vunpack.c.h.b16 %v607
    %v1375 = vunpack.c.l.b16 %v608
    %v1376 = vunpack.c.h.b16 %v608
    %v1377 = vunpack.c.l.b16 %v609
    %v1378 = vunpack.c.h.b16 %v609
    %v1379 = vunpack.c.l.b16 %v610
    %v1380 = vunpack.c.h.b16 %v610
    %v1381 = vunpack.c.l.b16 %v611
    %v1382 = vunpack.c.h.b16 %v611
    %v1383 = vunpack.c.l.b16 %v612
    %v1384 = vunpack.c.h.b16 %v612
    %v1385 = vunpack.c.l.b16 %v613
    %v1386 = vunpack.c.h.b16 %v613
    %v1387 = vunpack.c.l.b16 %v614
    %v1388 = vunpack.c.h.b16 %v614
    %v1389 = vunpack.c.l.b16 %v615
    %v1390 = vunpack.c.h.b16 %v615
    %v1391 = vunpack.c.l.b16 %v616
    %v1392 = vunpack.c.h.b16 %v616
    %v1393 = vunpack.c.l.b16 %v617
    %v1394 = vunpack.c.h.b16 %v617
    %v1395 = vunpack.c.l.b16 %v618
    %v1396 = vunpack.c.h.b16 %v618
    %v1397 = vunpack.c.l.b16 %v619
    %v1398 = vunpack.c.h.b16 %v619
    %v1399 = vunpack.c.l.b16 %v620
    %v1400 = vunpack.c.h.b16 %v620
    %v1401 = vunpack.c.l.b16 %v621
    %v1402 = vunpack.c.h.b16 %v621
    %v1403 = vunpack.c.l.b16 %v622
    %v1404 = vunpack.c.h.b16 %v622
    %v1405 = vunpack.c.l.b16 %v623
    %v1406 = vunpack.c.h.b16 %v623
    %v1407 = vunpack.c.l.b16 %v624
    %v1408 = vunpack.c.h.b16 %v624
    %v1409 = vunpack.c.l.b16 %v625
    %v1410 = vunpack.c.h.b16 %v625
    %v1411 = vunpack.c.l.b16 %v626
    %v1412 = vunpack.c.h.b16 %v626
    %v1413 = vunpack.c.l.b16 %v627
    %v1414 = vunpack.c.h.b16 %v627
    %v1415 = vunpack.c.l.b16 %v628
    %v1416 = vunpack.c.h.b16 %v628
    %v1417 = vunpack.c.l.b16 %v629
    %v1418 = vunpack.c.h.b16 %v629
    %v1419 = vunpack.c.l.b16 %v630
    %v1420 = vunpack.c.h.b16 %v630
    %v1421 = vpack.c.b16 %v913, %v909
    %v1422 = vpack.c.b16 %v914, %v910
    %v1423 = vpack.c.b16 %v915, %v911
    %v1424 = vpack.c.b16 %v916, %v912
    %v1425 = vpack.c.b16 %v921, %v917
    %v1426 = vpack.c.b16 %v922, %v918
    %v1427 = vpack.c.b16 %v923, %v919
    %v1428 = vpack.c.b16 %v924, %v920
    %v1429 = vpack.c.b16 %v929, %v925
    %v1430 = vpack.c.b16 %v930, %v926
    %v1431 = vpack.c.b16 %v931, %v927
    %v1432 = vpack.c.b16 %v932, %v928
    %v1433 = vpack.c.b16 %v937, %v933
    %v1434 = vpack.c.b16 %v938, %v934
    %v1435 = vpack.c.b16 %v939, %v935
    %v1436 = vpack.c.b16 %v940, %v936
    %v1437 = vpack.c.b16 %v945, %v941
    %v1438 = vpack.c.b16 %v946, %v942
    %v1439 = vpack.c.b16 %v947, %v943
    %v1440 = vpack.c.b16 %v948, %v944
    %v1441 = vpack.c.b16 %v953, %v949
    %v1442 = vpack.c.b16 %v954, %v950
    %v1443 = vpack.c.b16 %v955, %v951
    %v1444 = vpack.c.b16 %v956, %v952
    %v1445 = vpack.c.b16 %v961, %v957
    %v1446 = vpack.c.b16 %v962, %v958
    %v1447 = vpack.c.b16 %v963, %v959
    %v1448 = vpack.c.b16 %v964, %v960
    %v1449 = vpack.c.b16 %v969, %v965
    %v1450 = vpack.c.b16 %v970, %v966
    %v1451 = vpack.c.b16 %v971, %v967
    %v1452 = vpack.c.b16 %v972, %v968
    %v1453 = vpack.c.b16 %v977, %v973
    %v1454 = vpack.c.b16 %v978, %v974
    %v1455 = vpack.c.b16 %v979, %v975
    %v1456 = vpack.c.b16 %v980, %v976
    %v1457 = vpack.c.b16 %v985, %v981
    %v1458 = vpack.c.b16 %v986, %v982
    %v1459 = vpack.c.b16 %v987, %v983
    %v1460 = vpack.c.b16 %v988, %v984
    %v1461 = vpack.c.b16 %v993, %v989
    %v1462 = vpack.c.b16 %v994, %v990
    %v1463 = vpack.c.b16 %v995, %v991
    %v1464 = vpack.c.b16 %v996, %v992
    %v1465 = vpack.c.b16 %v1001, %v997
    %v1466 = vpack.c.b16 %v1002, %v998
    %v1467 = vpack.c.b16 %v1003, %v999
    %v1468 = vpack.c.b16 %v1004, %v1000
    %v1469 = vpack.c.b16 %v1009, %v1005
    %v1470 = vpack.c.b16 %v1010, %v1006
    %v1471 = vpack.c.b16 %v1011, %v1007
    %v1472 = vpack.c.b16 %v1012, %v1008
    %v1473 = vpack.c.b16 %v1017, %v1013
    %v1474 = vpack.c.b16 %v1018, %v1014
    %v1475 = vpack.c.b16 %v1019, %v1015
    %v1476 = vpack.c.b16 %v1020, %v1016
    %v1477 = vpack.c.b16 %v1025, %v1021
    %v1478 = vpack.c.b16 %v1026, %v1022
    %v1479 = vpack.c.b16 %v1027, %v1023
    %v1480 = vpack.c.b16 %v1028, %v1024
    %v1481 = vpack.c.b16 %v1033, %v1029
    %v1482 = vpack.c.b16 %v1034, %v1030
    %v1483 = vpack.c.b16 %v1035, %v1031
    %v1484 = vpack.c.b16 %v1036, %v1032
    %v1485 = vpack.c.b16 %v1041, %v1037
    %v1486 = vpack.c.b16 %v1042, %v1038
    %v1487 = vpack.c.b16 %v1043, %v1039
    %v1488 = vpack.c.b16 %v1044, %v1040
    %v1489 = vpack.c.b16 %v1049, %v1045
    %v1490 = vpack.c.b16 %v1050, %v1046
    %v1491 = vpack.c.b16 %v1051, %v1047
    %v1492 = vpack.c.b16 %v1052, %v1048
    %v1493 = vpack.c.b16 %v1057, %v1053
    %v1494 = vpack.c.b16 %v1058, %v1054
    %v1495 = vpack.c.b16 %v1059, %v1055
    %v1496 = vpack.c.b16 %v1060, %v1056
    %v1497 = vpack.c.b16 %v1065, %v1061
    %v1498 = vpack.c.b16 %v1066, %v1062
    %v1499 = vpack.c.b16 %v1067, %v1063
    %v1500 = vpack.c.b16 %v1068, %v1064
    %v1501 = vpack.c.b16 %v1073, %v1069
    %v1502 = vpack.c.b16 %v1074, %v1070
    %v1503 = vpack.c.b16 %v1075, %v1071
    %v1504 = vpack.c.b16 %v1076, %v1072
    %v1505 = vpack.c.b16 %v1081, %v1077
    %v1506 = vpack.c.b16 %v1082, %v1078
    %v1507 = vpack.c.b16 %v1083, %v1079
    %v1508 = vpack.c.b16 %v1084, %v1080
    %v1509 = vpack.c.b16 %v1089, %v1085
    %v1510 = vpack.c.b16 %v1090, %v1086
    %v1511 = vpack.c.b16 %v1091, %v1087
    %v1512 = vpack.c.b16 %v1092, %v1088
    %v1513 = vpack.c.b16 %v1097, %v1093
    %v1514 = vpack.c.b16 %v1098, %v1094
    %v1515 = vpack.c.b16 %v1099, %v1095
    %v1516 = vpack.c.b16 %v1100, %v1096
    %v1517 = vpack.c.b16 %v1105, %v1101
    %v1518 = vpack.c.b16 %v1106, %v1102
    %v1519 = vpack.c.b16 %v1107, %v1103
    %v1520 = vpack.c.b16 %v1108, %v1104
    %v1521 = vpack.c.b16 %v1113, %v1109
    %v1522 = vpack.c.b16 %v1114, %v1110
    %v1523 = vpack.c.b16 %v1115, %v1111
    %v1524 = vpack.c.b16 %v1116, %v1112
    %v1525 = vpack.c.b16 %v1121, %v1117
    %v1526 = vpack.c.b16 %v1122, %v1118
    %v1527 = vpack.c.b16 %v1123, %v1119
    %v1528 = vpack.c.b16 %v1124, %v1120
    %v1529 = vpack.c.b16 %v1129, %v1125
    %v1530 = vpack.c.b16 %v1130, %v1126
    %v1531 = vpack.c.b16 %v1131, %v1127
    %v1532 = vpack.c.b16 %v1132, %v1128
    %v1533 = vpack.c.b16 %v1137, %v1133
    %v1534 = vpack.c.b16 %v1138, %v1134
    %v1535 = vpack.c.b16 %v1139, %v1135
    %v1536 = vpack.c.b16 %v1140, %v1136
    %v1537 = vpack.c.b16 %v1145, %v1141
    %v1538 = vpack.c.b16 %v1146, %v1142
    %v1539 = vpack.c.b16 %v1147, %v1143
    %v1540 = vpack.c.b16 %v1148, %v1144
    %v1541 = vpack.c.b16 %v1153, %v1149
    %v1542 = vpack.c.b16 %v1154, %v1150
    %v1543 = vpack.c.b16 %v1155, %v1151
    %v1544 = vpack.c.b16 %v1156, %v1152
    %v1545 = vpack.c.b16 %v1161, %v1157
    %v1546 = vpack.c.b16 %v1162, %v1158
    %v1547 = vpack.c.b16 %v1163, %v1159
    %v1548 = vpack.c.b16 %v1164, %v1160
    %v1549 = vpack.c.b16 %v1169, %v1165
    %v1550 = vpack.c.b16 %v1170, %v1166
    %v1551 = vpack.c.b16 %v1171, %v1167
    %v1552 = vpack.c.b16 %v1172, %v1168
    %v1553 = vpack.c.b16 %v1177, %v1173
    %v1554 = vpack.c.b16 %v1178, %v1174
    %v1555 = vpack.c.b16 %v1179, %v1175
    %v1556 = vpack.c.b16 %v1180, %v1176
    %v1557 = vpack.c.b16 %v1185, %v1181
    %v1558 = vpack.c.b16 %v1186, %v1182
    %v1559 = vpack.c.b16 %v1187, %v1183
    %v1560 = vpack.c.b16 %v1188, %v1184
    %v1561 = vpack.c.b16 %v1193, %v1189
    %v1562 = vpack.c.b16 %v1194, %v1190
    %v1563 = vpack.c.b16 %v1195, %v1191
    %v1564 = vpack.c.b16 %v1196, %v1192
    %v1565 = vpack.c.b16 %v1201, %v1197
    %v1566 = vpack.c.b16 %v1202, %v1198
    %v1567 = vpack.c.b16 %v1203, %v1199
    %v1568 = vpack.c.b16 %v1204, %v1200
    %v1569 = vpack.c.b16 %v1209, %v1205
    %v1570 = vpack.c.b16 %v1210, %v1206
    %v1571 = vpack.c.b16 %v1211, %v1207
    %v1572 = vpack.c.b16 %v1212, %v1208
    %v1573 = vpack.c.b16 %v1217, %v1213
    %v1574 = vpack.c.b16 %v1218, %v1214
    %v1575 = vpack.c.b16 %v1219, %v1215
    %v1576 = vpack.c.b16 %v1220, %v1216
    %v1577 = vpack.c.b16 %v1225, %v1221
    %v1578 = vpack.c.b16 %v1226, %v1222
    %v1579 = vpack.c.b16 %v1227, %v1223
    %v1580 = vpack.c.b16 %v1228, %v1224
    %v1581 = vpack.c.b16 %v1233, %v1229
    %v1582 = vpack.c.b16 %v1234, %v1230
    %v1583 = vpack.c.b16 %v1235, %v1231
    %v1584 = vpack.c.b16 %v1236, %v1232
    %v1585 = vpack.c.b16 %v1241, %v1237
    %v1586 = vpack.c.b16 %v1242, %v1238
    %v1587 = vpack.c.b16 %v1243, %v1239
    %v1588 = vpack.c.b16 %v1244, %v1240
    %v1589 = vpack.c.b16 %v1249, %v1245
    %v1590 = vpack.c.b16 %v1250, %v1246
    %v1591 = vpack.c.b16 %v1251, %v1247
    %v1592 = vpack.c.b16 %v1252, %v1248
    %v1593 = vpack.c.b16 %v1257, %v1253
    %v1594 = vpack.c.b16 %v1258, %v1254
    %v1595 = vpack.c.b16 %v1259, %v1255
    %v1596 = vpack.c.b16 %v1260, %v1256
    %v1597 = vpack.c.b16 %v1265, %v1261
    %v1598 = vpack.c.b16 %v1266, %v1262
    %v1599 = vpack.c.b16 %v1267, %v1263
    %v1600 = vpack.c.b16 %v1268, %v1264
    %v1601 = vpack.c.b16 %v1273, %v1269
    %v1602 = vpack.c.b16 %v1274, %v1270
    %v1603 = vpack.c.b16 %v1275, %v1271
    %v1604 = vpack.c.b16 %v1276, %v1272
    %v1605 = vpack.c.b16 %v1281, %v1277
    %v1606 = vpack.c.b16 %v1282, %v1278
    %v1607 = vpack.c.b16 %v1283, %v1279
    %v1608 = vpack.c.b16 %v1284, %v1280
    %v1609 = vpack.c.b16 %v1289, %v1285
    %v1610 = vpack.c.b16 %v1290, %v1286
    %v1611 = vpack.c.b16 %v1291, %v1287
    %v1612 = vpack.c.b16 %v1292, %v1288
    %v1613 = vpack.c.b16 %v1297, %v1293
    %v1614 = vpack.c.b16 %v1298, %v1294
    %v1615 = vpack.c.b16 %v1299, %v1295
    %v1616 = vpack.c.b16 %v1300, %v1296
    %v1617 = vpack.c.b16 %v1305, %v1301
    %v1618 = vpack.c.b16 %v1306, %v1302
    %v1619 = vpack.c.b16 %v1307, %v1303
    %v1620 = vpack.c.b16 %v1308, %v1304
    %v1621 = vpack.c.b16 %v1313, %v1309
    %v1622 = vpack.c.b16 %v1314, %v1310
    %v1623 = vpack.c.b16 %v1315, %v1311
    %v1624 = vpack.c.b16 %v1316, %v1312
    %v1625 = vpack.c.b16 %v1321, %v1317
    %v1626 = vpack.c.b16 %v1322, %v1318
    %v1627 = vpack.c.b16 %v1323, %v1319
    %v1628 = vpack.c.b16 %v1324, %v1320
    %v1629 = vpack.c.b16 %v1329, %v1325
    %v1630 = vpack.c.b16 %v1330, %v1326
    %v1631 = vpack.c.b16 %v1331, %v1327
    %v1632 = vpack.c.b16 %v1332, %v1328
    %v1633 = vpack.c.b16 %v1337, %v1333
    %v1634 = vpack.c.b16 %v1338, %v1334
    %v1635 = vpack.c.b16 %v1339, %v1335
    %v1636 = vpack.c.b16 %v1340, %v1336
    %v1637 = vpack.c.b16 %v1345, %v1341
    %v1638 = vpack.c.b16 %v1346, %v1342
    %v1639 = vpack.c.b16 %v1347, %v1343
    %v1640 = vpack.c.b16 %v1348, %v1344
    %v1641 = vpack.c.b16 %v1353, %v1349
    %v1642 = vpack.c.b16 %v1354, %v1350
    %v1643 = vpack.c.b16 %v1355, %v1351
    %v1644 = vpack.c.b16 %v1356, %v1352
    %v1645 = vpack.c.b16 %v1361, %v1357
    %v1646 = vpack.c.b16 %v1362, %v1358
    %v1647 = vpack.c.b16 %v1363, %v1359
    %v1648 = vpack.c.b16 %v1364, %v1360
    %v1649 = vpack.c.b16 %v1369, %v1365
    %v1650 = vpack.c.b16 %v1370, %v1366
    %v1651 = vpack.c.b16 %v1371, %v1367
    %v1652 = vpack.c.b16 %v1372, %v1368
    %v1653 = vpack.c.b16 %v1377, %v1373
    %v1654 = vpack.c.b16 %v1378, %v1374
    %v1655 = vpack.c.b16 %v1379, %v1375
    %v1656 = vpack.c.b16 %v1380, %v1376
    %v1657 = vpack.c.b16 %v1385, %v1381
    %v1658 = vpack.c.b16 %v1386, %v1382
    %v1659 = vpack.c.b16 %v1387, %v1383
    %v1660 = vpack.c.b16 %v1388, %v1384
    %v1661 = vpack.c.b16 %v1393, %v1389
    %v1662 = vpack.c.b16 %v1394, %v1390
    %v1663 = vpack.c.b16 %v1395, %v1391
    %v1664 = vpack.c.b16 %v1396, %v1392
    %v1665 = vpack.c.b16 %v1401, %v1397
    %v1666 = vpack.c.b16 %v1402, %v1398
    %v1667 = vpack.c.b16 %v1403, %v1399
    %v1668 = vpack.c.b16 %v1404, %v1400
    %v1669 = vpack.c.b16 %v1409, %v1405
    %v1670 = vpack.c.b16 %v1410, %v1406
    %v1671 = vpack.c.b16 %v1411, %v1407
    %v1672 = vpack.c.b16 %v1412, %v1408
    %v1673 = vpack.c.b16 %v1417, %v1413
    %v1674 = vpack.c.b16 %v1418, %v1414
    %v1675 = vpack.c.b16 %v1419, %v1415
    %v1676 = vpack.c.b16 %v1420, %v1416
    %1933 = vmatprep.subr.bf16.mxu0 %v1450
    %1934 = vmatpush1.bf16.msra.mxu0 %v1449
    %1935 = vmatprep.subr.bf16.mxu0 %v1446
    %1936 = vmatpush1.bf16.msra.mxu0 %v1445
    %1937 = vmatprep.subr.bf16.mxu0 %v1442
    %1938 = vmatpush1.bf16.msra.mxu0 %v1441
    %1939 = vmatprep.subr.bf16.mxu0 %v1438
    %1940 = vmatpush1.bf16.msra.mxu0 %v1437
    %1941 = vmatprep.subr.bf16.mxu0 %v1434
    %1942 = vmatpush1.bf16.msra.mxu0 %v1433
    %1943 = vmatprep.subr.bf16.mxu0 %v1430
    %1944 = vmatpush1.bf16.msra.mxu0 %v1429
    %1945 = vmatprep.subr.bf16.mxu0 %v1426
    %1946 = vmatpush1.bf16.msra.mxu0 %v1425
    %1947 = vmatprep.subr.bf16.mxu0 %v1422
    %1948 = vmatpush1.bf16.msra.mxu0 %v1421
    %1949 = vmatprep.subr.bf16.mxu0 %v1482
    %1950 = vmatpush2.bf16.msra.mxu0 %v1481
    %1951 = vmatprep.subr.bf16.mxu0 %v1478
    %1952 = vmatpush2.bf16.msra.mxu0 %v1477
    %1953 = vmatprep.subr.bf16.mxu0 %v1474
    %1954 = vmatpush2.bf16.msra.mxu0 %v1473
    %1955 = vmatprep.subr.bf16.mxu0 %v1470
    %1956 = vmatpush2.bf16.msra.mxu0 %v1469
    %1957 = vmatprep.subr.bf16.mxu0 %v1466
    %1958 = vmatpush2.bf16.msra.mxu0 %v1465
    %1959 = vmatprep.subr.bf16.mxu0 %v1462
    %1960 = vmatpush2.bf16.msra.mxu0 %v1461
    %1961 = vmatprep.subr.bf16.mxu0 %v1458
    %1962 = vmatpush2.bf16.msra.mxu0 %v1457
    %1963 = vmatprep.subr.bf16.mxu0 %v1454
    %1964 = vmatpush2.bf16.msra.mxu0 %v1453
    %1965 = vmatprep.mubr.bf16.mxu0 %v368
    %1966 = vmatmul.mubr.bf16.gmra.mxu0 %v367
    %v1967 = vpop.f32.mrf.mxu0
    %v1968 = vadd.f32 %v636, %v1967
    %v1969 = vpop.f32.mrf.mxu0
    %v1970 = vadd.f32 %v640, %v1969
    %v1971 = vpop.f32.mrf.mxu0
    %v1972 = vpop.f32.mrf.mxu0
    %1973 = vdwg.mxu0
    %1974 = vmatprep.subr.bf16.mxu0 %v1514
    %1975 = vmatpush1.bf16.msra.mxu0 %v1513
    %1976 = vmatprep.subr.bf16.mxu0 %v1510
    %1977 = vmatpush1.bf16.msra.mxu0 %v1509
    %1978 = vmatprep.subr.bf16.mxu0 %v1506
    %1979 = vmatpush1.bf16.msra.mxu0 %v1505
    %1980 = vmatprep.subr.bf16.mxu0 %v1502
    %1981 = vmatpush1.bf16.msra.mxu0 %v1501
    %1982 = vmatprep.subr.bf16.mxu0 %v1498
    %1983 = vmatpush1.bf16.msra.mxu0 %v1497
    %1984 = vmatprep.subr.bf16.mxu0 %v1494
    %1985 = vmatpush1.bf16.msra.mxu0 %v1493
    %1986 = vmatprep.subr.bf16.mxu0 %v1490
    %1987 = vmatpush1.bf16.msra.mxu0 %v1489
    %1988 = vmatprep.subr.bf16.mxu0 %v1486
    %1989 = vmatpush1.bf16.msra.mxu0 %v1485
    %1990 = vmatprep.subr.bf16.mxu0 %v1546
    %1991 = vmatpush2.bf16.msra.mxu0 %v1545
    %1992 = vmatprep.subr.bf16.mxu0 %v1542
    %1993 = vmatpush2.bf16.msra.mxu0 %v1541
    %1994 = vmatprep.subr.bf16.mxu0 %v1538
    %1995 = vmatpush2.bf16.msra.mxu0 %v1537
    %1996 = vmatprep.subr.bf16.mxu0 %v1534
    %1997 = vmatpush2.bf16.msra.mxu0 %v1533
    %1998 = vmatprep.subr.bf16.mxu0 %v1530
    %1999 = vmatpush2.bf16.msra.mxu0 %v1529
    %2000 = vmatprep.subr.bf16.mxu0 %v1526
    %2001 = vmatpush2.bf16.msra.mxu0 %v1525
    %2002 = vmatprep.subr.bf16.mxu0 %v1522
    %2003 = vmatpush2.bf16.msra.mxu0 %v1521
    %2004 = vmatprep.subr.bf16.mxu0 %v1518
    %2005 = vmatpush2.bf16.msra.mxu0 %v1517
    %2006 = vmatprep.mubr.bf16.mxu0 %v370
    %2007 = vmatmul.mubr.bf16.gmra.mxu0 %v369
    %v2008 = vpop.f32.mrf.mxu0
    %v2009 = vadd.f32 %v1968, %v2008
    %v2010 = vpop.f32.mrf.mxu0
    %v2011 = vadd.f32 %v1970, %v2010
    %v2012 = vpop.f32.mrf.mxu0
    %v2013 = vpop.f32.mrf.mxu0
    %2014 = vdwg.mxu0
    %2015 = vmatprep.subr.bf16.mxu0 %v1578
    %2016 = vmatpush1.bf16.msra.mxu0 %v1577
    %2017 = vmatprep.subr.bf16.mxu0 %v1574
    %2018 = vmatpush1.bf16.msra.mxu0 %v1573
    %2019 = vmatprep.subr.bf16.mxu0 %v1570
    %2020 = vmatpush1.bf16.msra.mxu0 %v1569
    %2021 = vmatprep.subr.bf16.mxu0 %v1566
    %2022 = vmatpush1.bf16.msra.mxu0 %v1565
    %2023 = vmatprep.subr.bf16.mxu0 %v1562
    %2024 = vmatpush1.bf16.msra.mxu0 %v1561
    %2025 = vmatprep.subr.bf16.mxu0 %v1558
    %2026 = vmatpush1.bf16.msra.mxu0 %v1557
    %2027 = vmatprep.subr.bf16.mxu0 %v1554
    %2028 = vmatpush1.bf16.msra.mxu0 %v1553
    %2029 = vmatprep.subr.bf16.mxu0 %v1550
    %2030 = vmatpush1.bf16.msra.mxu0 %v1549
    %2031 = vmatprep.subr.bf16.mxu0 %v1610
    %2032 = vmatpush2.bf16.msra.mxu0 %v1609
    %2033 = vmatprep.subr.bf16.mxu0 %v1606
    %2034 = vmatpush2.bf16.msra.mxu0 %v1605
    %2035 = vmatprep.subr.bf16.mxu0 %v1602
    %2036 = vmatpush2.bf16.msra.mxu0 %v1601
    %2037 = vmatprep.subr.bf16.mxu0 %v1598
    %2038 = vmatpush2.bf16.msra.mxu0 %v1597
    %2039 = vmatprep.subr.bf16.mxu0 %v1594
    %2040 = vmatpush2.bf16.msra.mxu0 %v1593
    %2041 = vmatprep.subr.bf16.mxu0 %v1590
    %2042 = vmatpush2.bf16.msra.mxu0 %v1589
    %2043 = vmatprep.subr.bf16.mxu0 %v1586
    %2044 = vmatpush2.bf16.msra.mxu0 %v1585
    %2045 = vmatprep.subr.bf16.mxu0 %v1582
    %2046 = vmatpush2.bf16.msra.mxu0 %v1581
    %2047 = vmatprep.mubr.bf16.mxu0 %v372
    %2048 = vmatmul.mubr.bf16.gmra.mxu0 %v371
    %v2049 = vpop.f32.mrf.mxu0
    %v2050 = vadd.f32 %v2009, %v2049
    %v2051 = vpop.f32.mrf.mxu0
    %v2052 = vadd.f32 %v2011, %v2051
    %v2053 = vpop.f32.mrf.mxu0
    %v2054 = vpop.f32.mrf.mxu0
    %2055 = vdwg.mxu0
    %2056 = vmatprep.subr.bf16.mxu0 %v1642
    %2057 = vmatpush1.bf16.msra.mxu0 %v1641
    %2058 = vmatprep.subr.bf16.mxu0 %v1638
    %2059 = vmatpush1.bf16.msra.mxu0 %v1637
    %2060 = vmatprep.subr.bf16.mxu0 %v1634
    %2061 = vmatpush1.bf16.msra.mxu0 %v1633
    %2062 = vmatprep.subr.bf16.mxu0 %v1630
    %2063 = vmatpush1.bf16.msra.mxu0 %v1629
    %2064 = vmatprep.subr.bf16.mxu0 %v1626
    %2065 = vmatpush1.bf16.msra.mxu0 %v1625
    %2066 = vmatprep.subr.bf16.mxu0 %v1622
    %2067 = vmatpush1.bf16.msra.mxu0 %v1621
    %2068 = vmatprep.subr.bf16.mxu0 %v1618
    %2069 = vmatpush1.bf16.msra.mxu0 %v1617
    %2070 = vmatprep.subr.bf16.mxu0 %v1614
    %2071 = vmatpush1.bf16.msra.mxu0 %v1613
    %2072 = vmatprep.subr.bf16.mxu0 %v1674
    %2073 = vmatpush2.bf16.msra.mxu0 %v1673
    %2074 = vmatprep.subr.bf16.mxu0 %v1670
    %2075 = vmatpush2.bf16.msra.mxu0 %v1669
    %2076 = vmatprep.subr.bf16.mxu0 %v1666
    %2077 = vmatpush2.bf16.msra.mxu0 %v1665
    %2078 = vmatprep.subr.bf16.mxu0 %v1662
    %2079 = vmatpush2.bf16.msra.mxu0 %v1661
    %2080 = vmatprep.subr.bf16.mxu0 %v1658
    %2081 = vmatpush2.bf16.msra.mxu0 %v1657
    %2082 = vmatprep.subr.bf16.mxu0 %v1654
    %2083 = vmatpush2.bf16.msra.mxu0 %v1653
    %2084 = vmatprep.subr.bf16.mxu0 %v1650
    %2085 = vmatpush2.bf16.msra.mxu0 %v1649
    %2086 = vmatprep.subr.bf16.mxu0 %v1646
    %2087 = vmatpush2.bf16.msra.mxu0 %v1645
    %2088 = vmatprep.mubr.bf16.mxu0 %v374
    %2089 = vmatmul.mubr.bf16.gmra.mxu0 %v373
    %v2090 = vpop.f32.mrf.mxu0
    %v2091 = vadd.f32 %v2050, %v2090
    %v2092 = vpop.f32.mrf.mxu0
    %v2093 = vadd.f32 %v2052, %v2092
    %v2094 = vpop.f32.mrf.mxu0
    %v2095 = vpop.f32.mrf.mxu0
    %2096 = vdwg.mxu0
    %2097 = vmatprep.subr.bf16.mxu0 %v1452
    %2098 = vmatpush1.bf16.msra.mxu0 %v1451
    %2099 = vmatprep.subr.bf16.mxu0 %v1448
    %2100 = vmatpush1.bf16.msra.mxu0 %v1447
    %2101 = vmatprep.subr.bf16.mxu0 %v1444
    %2102 = vmatpush1.bf16.msra.mxu0 %v1443
    %2103 = vmatprep.subr.bf16.mxu0 %v1440
    %2104 = vmatpush1.bf16.msra.mxu0 %v1439
    %2105 = vmatprep.subr.bf16.mxu0 %v1436
    %2106 = vmatpush1.bf16.msra.mxu0 %v1435
    %2107 = vmatprep.subr.bf16.mxu0 %v1432
    %2108 = vmatpush1.bf16.msra.mxu0 %v1431
    %2109 = vmatprep.subr.bf16.mxu0 %v1428
    %2110 = vmatpush1.bf16.msra.mxu0 %v1427
    %2111 = vmatprep.subr.bf16.mxu0 %v1424
    %2112 = vmatpush1.bf16.msra.mxu0 %v1423
    %2113 = vmatprep.subr.bf16.mxu0 %v1484
    %2114 = vmatpush2.bf16.msra.mxu0 %v1483
    %2115 = vmatprep.subr.bf16.mxu0 %v1480
    %2116 = vmatpush2.bf16.msra.mxu0 %v1479
    %2117 = vmatprep.subr.bf16.mxu0 %v1476
    %2118 = vmatpush2.bf16.msra.mxu0 %v1475
    %2119 = vmatprep.subr.bf16.mxu0 %v1472
    %2120 = vmatpush2.bf16.msra.mxu0 %v1471
    %2121 = vmatprep.subr.bf16.mxu0 %v1468
    %2122 = vmatpush2.bf16.msra.mxu0 %v1467
    %2123 = vmatprep.subr.bf16.mxu0 %v1464
    %2124 = vmatpush2.bf16.msra.mxu0 %v1463
    %2125 = vmatprep.subr.bf16.mxu0 %v1460
    %2126 = vmatpush2.bf16.msra.mxu0 %v1459
    %2127 = vmatprep.subr.bf16.mxu0 %v1456
    %2128 = vmatpush2.bf16.msra.mxu0 %v1455
    %2129 = vmatprep.mubr.bf16.mxu0 %v368
    %2130 = vmatmul.mubr.bf16.gmra.mxu0 %v367
    %v2131 = vpop.f32.mrf.mxu0
    %v2132 = vadd.f32 %v644, %v2131
    %v2133 = vpop.f32.mrf.mxu0
    %v2134 = vadd.f32 %v648, %v2133
    %v2135 = vpop.f32.mrf.mxu0
    %v2136 = vpop.f32.mrf.mxu0
    %2137 = vdwg.mxu0
    %2138 = vmatprep.subr.bf16.mxu0 %v1516
    %2139 = vmatpush1.bf16.msra.mxu0 %v1515
    %2140 = vmatprep.subr.bf16.mxu0 %v1512
    %2141 = vmatpush1.bf16.msra.mxu0 %v1511
    %2142 = vmatprep.subr.bf16.mxu0 %v1508
    %2143 = vmatpush1.bf16.msra.mxu0 %v1507
    %2144 = vmatprep.subr.bf16.mxu0 %v1504
    %2145 = vmatpush1.bf16.msra.mxu0 %v1503
    %2146 = vmatprep.subr.bf16.mxu0 %v1500
    %2147 = vmatpush1.bf16.msra.mxu0 %v1499
    %2148 = vmatprep.subr.bf16.mxu0 %v1496
    %2149 = vmatpush1.bf16.msra.mxu0 %v1495
    %2150 = vmatprep.subr.bf16.mxu0 %v1492
    %2151 = vmatpush1.bf16.msra.mxu0 %v1491
    %2152 = vmatprep.subr.bf16.mxu0 %v1488
    %2153 = vmatpush1.bf16.msra.mxu0 %v1487
    %2154 = vmatprep.subr.bf16.mxu0 %v1548
    %2155 = vmatpush2.bf16.msra.mxu0 %v1547
    %2156 = vmatprep.subr.bf16.mxu0 %v1544
    %2157 = vmatpush2.bf16.msra.mxu0 %v1543
    %2158 = vmatprep.subr.bf16.mxu0 %v1540
    %2159 = vmatpush2.bf16.msra.mxu0 %v1539
    %2160 = vmatprep.subr.bf16.mxu0 %v1536
    %2161 = vmatpush2.bf16.msra.mxu0 %v1535
    %2162 = vmatprep.subr.bf16.mxu0 %v1532
    %2163 = vmatpush2.bf16.msra.mxu0 %v1531
    %2164 = vmatprep.subr.bf16.mxu0 %v1528
    %2165 = vmatpush2.bf16.msra.mxu0 %v1527
    %2166 = vmatprep.subr.bf16.mxu0 %v1524
    %2167 = vmatpush2.bf16.msra.mxu0 %v1523
    %2168 = vmatprep.subr.bf16.mxu0 %v1520
    %2169 = vmatpush2.bf16.msra.mxu0 %v1519
    %2170 = vmatprep.mubr.bf16.mxu0 %v370
    %2171 = vmatmul.mubr.bf16.gmra.mxu0 %v369
    %v2172 = vpop.f32.mrf.mxu0
    %v2173 = vadd.f32 %v2132, %v2172
    %v2174 = vpop.f32.mrf.mxu0
    %v2175 = vadd.f32 %v2134, %v2174
    %v2176 = vpop.f32.mrf.mxu0
    %v2177 = vpop.f32.mrf.mxu0
    %2178 = vdwg.mxu0
    %2179 = vmatprep.subr.bf16.mxu0 %v1580
    %2180 = vmatpush1.bf16.msra.mxu0 %v1579
    %2181 = vmatprep.subr.bf16.mxu0 %v1576
    %2182 = vmatpush1.bf16.msra.mxu0 %v1575
    %2183 = vmatprep.subr.bf16.mxu0 %v1572
    %2184 = vmatpush1.bf16.msra.mxu0 %v1571
    %2185 = vmatprep.subr.bf16.mxu0 %v1568
    %2186 = vmatpush1.bf16.msra.mxu0 %v1567
    %2187 = vmatprep.subr.bf16.mxu0 %v1564
    %2188 = vmatpush1.bf16.msra.mxu0 %v1563
    %2189 = vmatprep.subr.bf16.mxu0 %v1560
    %2190 = vmatpush1.bf16.msra.mxu0 %v1559
    %2191 = vmatprep.subr.bf16.mxu0 %v1556
    %2192 = vmatpush1.bf16.msra.mxu0 %v1555
    %2193 = vmatprep.subr.bf16.mxu0 %v1552
    %2194 = vmatpush1.bf16.msra.mxu0 %v1551
    %2195 = vmatprep.subr.bf16.mxu0 %v1612
    %2196 = vmatpush2.bf16.msra.mxu0 %v1611
    %2197 = vmatprep.subr.bf16.mxu0 %v1608
    %2198 = vmatpush2.bf16.msra.mxu0 %v1607
    %2199 = vmatprep.subr.bf16.mxu0 %v1604
    %2200 = vmatpush2.bf16.msra.mxu0 %v1603
    %2201 = vmatprep.subr.bf16.mxu0 %v1600
    %2202 = vmatpush2.bf16.msra.mxu0 %v1599
    %2203 = vmatprep.subr.bf16.mxu0 %v1596
    %2204 = vmatpush2.bf16.msra.mxu0 %v1595
    %2205 = vmatprep.subr.bf16.mxu0 %v1592
    %2206 = vmatpush2.bf16.msra.mxu0 %v1591
    %2207 = vmatprep.subr.bf16.mxu0 %v1588
    %2208 = vmatpush2.bf16.msra.mxu0 %v1587
    %2209 = vmatprep.subr.bf16.mxu0 %v1584
    %2210 = vmatpush2.bf16.msra.mxu0 %v1583
    %2211 = vmatprep.mubr.bf16.mxu0 %v372
    %2212 = vmatmul.mubr.bf16.gmra.mxu0 %v371
    %v2213 = vpop.f32.mrf.mxu0
    %v2214 = vadd.f32 %v2173, %v2213
    %v2215 = vpop.f32.mrf.mxu0
    %v2216 = vadd.f32 %v2175, %v2215
    %v2217 = vpop.f32.mrf.mxu0
    %v2218 = vpop.f32.mrf.mxu0
    %2219 = vdwg.mxu0
    %2220 = vmatprep.subr.bf16.mxu0 %v1644
    %2221 = vmatpush1.bf16.msra.mxu0 %v1643
    %2222 = vmatprep.subr.bf16.mxu0 %v1640
    %2223 = vmatpush1.bf16.msra.mxu0 %v1639
    %2224 = vmatprep.subr.bf16.mxu0 %v1636
    %2225 = vmatpush1.bf16.msra.mxu0 %v1635
    %2226 = vmatprep.subr.bf16.mxu0 %v1632
    %2227 = vmatpush1.bf16.msra.mxu0 %v1631
    %2228 = vmatprep.subr.bf16.mxu0 %v1628
    %2229 = vmatpush1.bf16.msra.mxu0 %v1627
    %2230 = vmatprep.subr.bf16.mxu0 %v1624
    %2231 = vmatpush1.bf16.msra.mxu0 %v1623
    %2232 = vmatprep.subr.bf16.mxu0 %v1620
    %2233 = vmatpush1.bf16.msra.mxu0 %v1619
    %2234 = vmatprep.subr.bf16.mxu0 %v1616
    %2235 = vmatpush1.bf16.msra.mxu0 %v1615
    %2236 = vmatprep.subr.bf16.mxu0 %v1676
    %2237 = vmatpush2.bf16.msra.mxu0 %v1675
    %2238 = vmatprep.subr.bf16.mxu0 %v1672
    %2239 = vmatpush2.bf16.msra.mxu0 %v1671
    %2240 = vmatprep.subr.bf16.mxu0 %v1668
    %2241 = vmatpush2.bf16.msra.mxu0 %v1667
    %2242 = vmatprep.subr.bf16.mxu0 %v1664
    %2243 = vmatpush2.bf16.msra.mxu0 %v1663
    %2244 = vmatprep.subr.bf16.mxu0 %v1660
    %2245 = vmatpush2.bf16.msra.mxu0 %v1659
    %2246 = vmatprep.subr.bf16.mxu0 %v1656
    %2247 = vmatpush2.bf16.msra.mxu0 %v1655
    %2248 = vmatprep.subr.bf16.mxu0 %v1652
    %2249 = vmatpush2.bf16.msra.mxu0 %v1651
    %2250 = vmatprep.subr.bf16.mxu0 %v1648
    %2251 = vmatpush2.bf16.msra.mxu0 %v1647
    %2252 = vmatprep.mubr.bf16.mxu0 %v374
    %2253 = vmatmul.mubr.bf16.gmra.mxu0 %v373
    %v2254 = vpop.f32.mrf.mxu0
    %v2255 = vadd.f32 %v2214, %v2254
    %v2256 = vpop.f32.mrf.mxu0
    %v2257 = vadd.f32 %v2216, %v2256
    %v2258 = vpop.f32.mrf.mxu0
    %v2259 = vpop.f32.mrf.mxu0
    %2260 = vdwg.mxu0
    %vm2261 = vcmp.gt.f32.partialorder %v2091, 0.0
    %vm2262 = vcmp.gt.f32.partialorder %v2093, 0.0
    %vm2263 = vcmp.gt.f32.partialorder %v2255, 0.0
    %vm2264 = vcmp.gt.f32.partialorder %v2257, 0.0
    %v2265 = vmul.f32 %v2091, 0.2
    %v2266 = vmul.f32 %v2093, 0.2
    %v2267 = vmul.f32 %v2255, 0.2
    %v2268 = vmul.f32 %v2257, 0.2
    %v2269 = vsel %vm2261, %v2091, %v2265
    %v2270 = vsel %vm2262, %v2093, %v2266
    %v2271 = vsel %vm2263, %v2255, %v2267
    %v2272 = vsel %vm2264, %v2257, %v2268
    %v2273 = vpack.c.bf16 %v2269, %v2269
    %v2274 = vpack.c.bf16 %v2270, %v2270
    %v2275 = vpack.c.bf16 %v2271, %v2271
    %v2276 = vpack.c.bf16 %v2272, %v2272
    %v2277 = vld [vmem:[%s5] sm:$0xff]
    %v2278 = vld [vmem:[%s5 + $0x8] sm:$0xff]
    %v2279 = vld [vmem:[%s5 + $0x10] sm:$0xff]
    %v2280 = vld [vmem:[%s5 + $0x18] sm:$0xff]
    %v2281 = vld [vmem:[%s5 + $0x20] sm:$0xff]
    %v2282 = vld [vmem:[%s5 + $0x28] sm:$0xff]
    %v2283 = vld [vmem:[%s5 + $0x30] sm:$0xff]
    %v2284 = vld [vmem:[%s5 + $0x38] sm:$0xff]
    %v2285 = vld [vmem:[%s5 + $0x40] sm:$0xff]
    %v2286 = vld [vmem:[%s5 + $0x48] sm:$0xff]
    %v2287 = vld [vmem:[%s5 + $0x50] sm:$0xff]
    %v2288 = vld [vmem:[%s5 + $0x58] sm:$0xff]
    %v2289 = vld [vmem:[%s5 + $0x60] sm:$0xff]
    %v2290 = vld [vmem:[%s5 + $0x68] sm:$0xff]
    %v2291 = vld [vmem:[%s5 + $0x70] sm:$0xff]
    %v2292 = vld [vmem:[%s5 + $0x78] sm:$0xff]
    %v2293 = vld [vmem:[%s5 + $0x80] sm:$0xff]
    %v2294 = vld [vmem:[%s5 + $0x88] sm:$0xff]
    %v2295 = vld [vmem:[%s5 + $0x90] sm:$0xff]
    %v2296 = vld [vmem:[%s5 + $0x98] sm:$0xff]
    %v2297 = vld [vmem:[%s5 + $0xa0] sm:$0xff]
    %v2298 = vld [vmem:[%s5 + $0xa8] sm:$0xff]
    %v2299 = vld [vmem:[%s5 + $0xb0] sm:$0xff]
    %v2300 = vld [vmem:[%s5 + $0xb8] sm:$0xff]
    %v2301 = vld [vmem:[%s5 + $0xc0] sm:$0xff]
    %v2302 = vld [vmem:[%s5 + $0xc8] sm:$0xff]
    %v2303 = vld [vmem:[%s5 + $0xd0] sm:$0xff]
    %v2304 = vld [vmem:[%s5 + $0xd8] sm:$0xff]
    %v2305 = vld [vmem:[%s5 + $0xe0] sm:$0xff]
    %v2306 = vld [vmem:[%s5 + $0xe8] sm:$0xff]
    %v2307 = vld [vmem:[%s5 + $0xf0] sm:$0xff]
    %v2308 = vld [vmem:[%s5 + $0xf8] sm:$0xff]
    %v2309 = vld [vmem:[%s5 + $0x100] sm:$0xff]
    %v2310 = vld [vmem:[%s5 + $0x108] sm:$0xff]
    %v2311 = vld [vmem:[%s5 + $0x110] sm:$0xff]
    %v2312 = vld [vmem:[%s5 + $0x118] sm:$0xff]
    %v2313 = vld [vmem:[%s5 + $0x120] sm:$0xff]
    %v2314 = vld [vmem:[%s5 + $0x128] sm:$0xff]
    %v2315 = vld [vmem:[%s5 + $0x130] sm:$0xff]
    %v2316 = vld [vmem:[%s5 + $0x138] sm:$0xff]
    %v2317 = vld [vmem:[%s5 + $0x140] sm:$0xff]
    %v2318 = vld [vmem:[%s5 + $0x148] sm:$0xff]
    %v2319 = vld [vmem:[%s5 + $0x150] sm:$0xff]
    %v2320 = vld [vmem:[%s5 + $0x158] sm:$0xff]
    %v2321 = vld [vmem:[%s5 + $0x160] sm:$0xff]
    %v2322 = vld [vmem:[%s5 + $0x168] sm:$0xff]
    %v2323 = vld [vmem:[%s5 + $0x170] sm:$0xff]
    %v2324 = vld [vmem:[%s5 + $0x178] sm:$0xff]
    %v2325 = vld [vmem:[%s5 + $0x180] sm:$0xff]
    %v2326 = vld [vmem:[%s5 + $0x188] sm:$0xff]
    %v2327 = vld [vmem:[%s5 + $0x190] sm:$0xff]
    %v2328 = vld [vmem:[%s5 + $0x198] sm:$0xff]
    %v2329 = vld [vmem:[%s5 + $0x1a0] sm:$0xff]
    %v2330 = vld [vmem:[%s5 + $0x1a8] sm:$0xff]
    %v2331 = vld [vmem:[%s5 + $0x1b0] sm:$0xff]
    %v2332 = vld [vmem:[%s5 + $0x1b8] sm:$0xff]
    %v2333 = vld [vmem:[%s5 + $0x1c0] sm:$0xff]
    %v2334 = vld [vmem:[%s5 + $0x1c8] sm:$0xff]
    %v2335 = vld [vmem:[%s5 + $0x1d0] sm:$0xff]
    %v2336 = vld [vmem:[%s5 + $0x1d8] sm:$0xff]
    %v2337 = vld [vmem:[%s5 + $0x1e0] sm:$0xff]
    %v2338 = vld [vmem:[%s5 + $0x1e8] sm:$0xff]
    %v2339 = vld [vmem:[%s5 + $0x1f0] sm:$0xff]
    %v2340 = vld [vmem:[%s5 + $0x1f8] sm:$0xff]
    %v2341 = vld [vmem:[%s6] sm:$0x3]
    %v2343 = vlaneseq
    %v2344 = vshrl.u32 %v2343, 7
    %v2345 = vsub.s32 0, %v2344
    %v2346 = vrot.slane %v2341, %v2345
    %v2347 = vlaneseq
    %v2348 = vshrl.u32 %v2347, 7
    %v2349 = vsub.s32 1, %v2348
    %v2350 = vrot.slane %v2341, %v2349
    %v2417 = vunpack.c.l.b16 %v2277
    %v2418 = vunpack.c.h.b16 %v2277
    %v2419 = vunpack.c.l.b16 %v2278
    %v2420 = vunpack.c.h.b16 %v2278
    %v2421 = vunpack.c.l.b16 %v2279
    %v2422 = vunpack.c.h.b16 %v2279
    %v2423 = vunpack.c.l.b16 %v2280
    %v2424 = vunpack.c.h.b16 %v2280
    %v2425 = vunpack.c.l.b16 %v2281
    %v2426 = vunpack.c.h.b16 %v2281
    %v2427 = vunpack.c.l.b16 %v2282
    %v2428 = vunpack.c.h.b16 %v2282
    %v2429 = vunpack.c.l.b16 %v2283
    %v2430 = vunpack.c.h.b16 %v2283
    %v2431 = vunpack.c.l.b16 %v2284
    %v2432 = vunpack.c.h.b16 %v2284
    %v2433 = vunpack.c.l.b16 %v2285
    %v2434 = vunpack.c.h.b16 %v2285
    %v2435 = vunpack.c.l.b16 %v2286
    %v2436 = vunpack.c.h.b16 %v2286
    %v2437 = vunpack.c.l.b16 %v2287
    %v2438 = vunpack.c.h.b16 %v2287
    %v2439 = vunpack.c.l.b16 %v2288
    %v2440 = vunpack.c.h.b16 %v2288
    %v2441 = vunpack.c.l.b16 %v2289
    %v2442 = vunpack.c.h.b16 %v2289
    %v2443 = vunpack.c.l.b16 %v2290
    %v2444 = vunpack.c.h.b16 %v2290
    %v2445 = vunpack.c.l.b16 %v2291
    %v2446 = vunpack.c.h.b16 %v2291
    %v2447 = vunpack.c.l.b16 %v2292
    %v2448 = vunpack.c.h.b16 %v2292
    %v2449 = vunpack.c.l.b16 %v2293
    %v2450 = vunpack.c.h.b16 %v2293
    %v2451 = vunpack.c.l.b16 %v2294
    %v2452 = vunpack.c.h.b16 %v2294
    %v2453 = vunpack.c.l.b16 %v2295
    %v2454 = vunpack.c.h.b16 %v2295
    %v2455 = vunpack.c.l.b16 %v2296
    %v2456 = vunpack.c.h.b16 %v2296
    %v2457 = vunpack.c.l.b16 %v2297
    %v2458 = vunpack.c.h.b16 %v2297
    %v2459 = vunpack.c.l.b16 %v2298
    %v2460 = vunpack.c.h.b16 %v2298
    %v2461 = vunpack.c.l.b16 %v2299
    %v2462 = vunpack.c.h.b16 %v2299
    %v2463 = vunpack.c.l.b16 %v2300
    %v2464 = vunpack.c.h.b16 %v2300
    %v2465 = vunpack.c.l.b16 %v2301
    %v2466 = vunpack.c.h.b16 %v2301
    %v2467 = vunpack.c.l.b16 %v2302
    %v2468 = vunpack.c.h.b16 %v2302
    %v2469 = vunpack.c.l.b16 %v2303
    %v2470 = vunpack.c.h.b16 %v2303
    %v2471 = vunpack.c.l.b16 %v2304
    %v2472 = vunpack.c.h.b16 %v2304
    %v2473 = vunpack.c.l.b16 %v2305
    %v2474 = vunpack.c.h.b16 %v2305
    %v2475 = vunpack.c.l.b16 %v2306
    %v2476 = vunpack.c.h.b16 %v2306
    %v2477 = vunpack.c.l.b16 %v2307
    %v2478 = vunpack.c.h.b16 %v2307
    %v2479 = vunpack.c.l.b16 %v2308
    %v2480 = vunpack.c.h.b16 %v2308
    %v2481 = vunpack.c.l.b16 %v2309
    %v2482 = vunpack.c.h.b16 %v2309
    %v2483 = vunpack.c.l.b16 %v2310
    %v2484 = vunpack.c.h.b16 %v2310
    %v2485 = vunpack.c.l.b16 %v2311
    %v2486 = vunpack.c.h.b16 %v2311
    %v2487 = vunpack.c.l.b16 %v2312
    %v2488 = vunpack.c.h.b16 %v2312
    %v2489 = vunpack.c.l.b16 %v2313
    %v2490 = vunpack.c.h.b16 %v2313
    %v2491 = vunpack.c.l.b16 %v2314
    %v2492 = vunpack.c.h.b16 %v2314
    %v2493 = vunpack.c.l.b16 %v2315
    %v2494 = vunpack.c.h.b16 %v2315
    %v2495 = vunpack.c.l.b16 %v2316
    %v2496 = vunpack.c.h.b16 %v2316
    %v2497 = vunpack.c.l.b16 %v2317
    %v2498 = vunpack.c.h.b16 %v2317
    %v2499 = vunpack.c.l.b16 %v2318
    %v2500 = vunpack.c.h.b16 %v2318
    %v2501 = vunpack.c.l.b16 %v2319
    %v2502 = vunpack.c.h.b16 %v2319
    %v2503 = vunpack.c.l.b16 %v2320
    %v2504 = vunpack.c.h.b16 %v2320
    %v2505 = vunpack.c.l.b16 %v2321
    %v2506 = vunpack.c.h.b16 %v2321
    %v2507 = vunpack.c.l.b16 %v2322
    %v2508 = vunpack.c.h.b16 %v2322
    %v2509 = vunpack.c.l.b16 %v2323
    %v2510 = vunpack.c.h.b16 %v2323
    %v2511 = vunpack.c.l.b16 %v2324
    %v2512 = vunpack.c.h.b16 %v2324
    %v2513 = vunpack.c.l.b16 %v2325
    %v2514 = vunpack.c.h.b16 %v2325
    %v2515 = vunpack.c.l.b16 %v2326
    %v2516 = vunpack.c.h.b16 %v2326
    %v2517 = vunpack.c.l.b16 %v2327
    %v2518 = vunpack.c.h.b16 %v2327
    %v2519 = vunpack.c.l.b16 %v2328
    %v2520 = vunpack.c.h.b16 %v2328
    %v2521 = vunpack.c.l.b16 %v2329
    %v2522 = vunpack.c.h.b16 %v2329
    %v2523 = vunpack.c.l.b16 %v2330
    %v2524 = vunpack.c.h.b16 %v2330
    %v2525 = vunpack.c.l.b16 %v2331
    %v2526 = vunpack.c.h.b16 %v2331
    %v2527 = vunpack.c.l.b16 %v2332
    %v2528 = vunpack.c.h.b16 %v2332
    %v2529 = vunpack.c.l.b16 %v2333
    %v2530 = vunpack.c.h.b16 %v2333
    %v2531 = vunpack.c.l.b16 %v2334
    %v2532 = vunpack.c.h.b16 %v2334
    %v2533 = vunpack.c.l.b16 %v2335
    %v2534 = vunpack.c.h.b16 %v2335
    %v2535 = vunpack.c.l.b16 %v2336
    %v2536 = vunpack.c.h.b16 %v2336
    %v2537 = vunpack.c.l.b16 %v2337
    %v2538 = vunpack.c.h.b16 %v2337
    %v2539 = vunpack.c.l.b16 %v2338
    %v2540 = vunpack.c.h.b16 %v2338
    %v2541 = vunpack.c.l.b16 %v2339
    %v2542 = vunpack.c.h.b16 %v2339
    %v2543 = vunpack.c.l.b16 %v2340
    %v2544 = vunpack.c.h.b16 %v2340
    %v2545 = vpack.c.b16 %v2419, %v2417
    %v2546 = vpack.c.b16 %v2420, %v2418
    %v2547 = vpack.c.b16 %v2423, %v2421
    %v2548 = vpack.c.b16 %v2424, %v2422
    %v2549 = vpack.c.b16 %v2427, %v2425
    %v2550 = vpack.c.b16 %v2428, %v2426
    %v2551 = vpack.c.b16 %v2431, %v2429
    %v2552 = vpack.c.b16 %v2432, %v2430
    %v2553 = vpack.c.b16 %v2435, %v2433
    %v2554 = vpack.c.b16 %v2436, %v2434
    %v2555 = vpack.c.b16 %v2439, %v2437
    %v2556 = vpack.c.b16 %v2440, %v2438
    %v2557 = vpack.c.b16 %v2443, %v2441
    %v2558 = vpack.c.b16 %v2444, %v2442
    %v2559 = vpack.c.b16 %v2447, %v2445
    %v2560 = vpack.c.b16 %v2448, %v2446
    %v2561 = vpack.c.b16 %v2451, %v2449
    %v2562 = vpack.c.b16 %v2452, %v2450
    %v2563 = vpack.c.b16 %v2455, %v2453
    %v2564 = vpack.c.b16 %v2456, %v2454
    %v2565 = vpack.c.b16 %v2459, %v2457
    %v2566 = vpack.c.b16 %v2460, %v2458
    %v2567 = vpack.c.b16 %v2463, %v2461
    %v2568 = vpack.c.b16 %v2464, %v2462
    %v2569 = vpack.c.b16 %v2467, %v2465
    %v2570 = vpack.c.b16 %v2468, %v2466
    %v2571 = vpack.c.b16 %v2471, %v2469
    %v2572 = vpack.c.b16 %v2472, %v2470
    %v2573 = vpack.c.b16 %v2475, %v2473
    %v2574 = vpack.c.b16 %v2476, %v2474
    %v2575 = vpack.c.b16 %v2479, %v2477
    %v2576 = vpack.c.b16 %v2480, %v2478
    %v2577 = vpack.c.b16 %v2483, %v2481
    %v2578 = vpack.c.b16 %v2484, %v2482
    %v2579 = vpack.c.b16 %v2487, %v2485
    %v2580 = vpack.c.b16 %v2488, %v2486
    %v2581 = vpack.c.b16 %v2491, %v2489
    %v2582 = vpack.c.b16 %v2492, %v2490
    %v2583 = vpack.c.b16 %v2495, %v2493
    %v2584 = vpack.c.b16 %v2496, %v2494
    %v2585 = vpack.c.b16 %v2499, %v2497
    %v2586 = vpack.c.b16 %v2500, %v2498
    %v2587 = vpack.c.b16 %v2503, %v2501
    %v2588 = vpack.c.b16 %v2504, %v2502
    %v2589 = vpack.c.b16 %v2507, %v2505
    %v2590 = vpack.c.b16 %v2508, %v2506
    %v2591 = vpack.c.b16 %v2511, %v2509
    %v2592 = vpack.c.b16 %v2512, %v2510
    %v2593 = vpack.c.b16 %v2515, %v2513
    %v2594 = vpack.c.b16 %v2516, %v2514
    %v2595 = vpack.c.b16 %v2519, %v2517
    %v2596 = vpack.c.b16 %v2520, %v2518
    %v2597 = vpack.c.b16 %v2523, %v2521
    %v2598 = vpack.c.b16 %v2524, %v2522
    %v2599 = vpack.c.b16 %v2527, %v2525
    %v2600 = vpack.c.b16 %v2528, %v2526
    %v2601 = vpack.c.b16 %v2531, %v2529
    %v2602 = vpack.c.b16 %v2532, %v2530
    %v2603 = vpack.c.b16 %v2535, %v2533
    %v2604 = vpack.c.b16 %v2536, %v2534
    %v2605 = vpack.c.b16 %v2539, %v2537
    %v2606 = vpack.c.b16 %v2540, %v2538
    %v2607 = vpack.c.b16 %v2543, %v2541
    %v2608 = vpack.c.b16 %v2544, %v2542
    %2673 = vmatprep.subr.bf16.mxu0 %v2560
    %2674 = vmatpush1.bf16.msra.mxu0 %v2559
    %2675 = vmatprep.subr.bf16.mxu0 %v2558
    %2676 = vmatpush1.bf16.msra.mxu0 %v2557
    %2677 = vmatprep.subr.bf16.mxu0 %v2556
    %2678 = vmatpush1.bf16.msra.mxu0 %v2555
    %2679 = vmatprep.subr.bf16.mxu0 %v2554
    %2680 = vmatpush1.bf16.msra.mxu0 %v2553
    %2681 = vmatprep.subr.bf16.mxu0 %v2552
    %2682 = vmatpush1.bf16.msra.mxu0 %v2551
    %2683 = vmatprep.subr.bf16.mxu0 %v2550
    %2684 = vmatpush1.bf16.msra.mxu0 %v2549
    %2685 = vmatprep.subr.bf16.mxu0 %v2548
    %2686 = vmatpush1.bf16.msra.mxu0 %v2547
    %2687 = vmatprep.subr.bf16.mxu0 %v2546
    %2688 = vmatpush1.bf16.msra.mxu0 %v2545
    %2689 = vmatprep.subr.bf16.mxu0 %v2576
    %2690 = vmatpush2.bf16.msra.mxu0 %v2575
    %2691 = vmatprep.subr.bf16.mxu0 %v2574
    %2692 = vmatpush2.bf16.msra.mxu0 %v2573
    %2693 = vmatprep.subr.bf16.mxu0 %v2572
    %2694 = vmatpush2.bf16.msra.mxu0 %v2571
    %2695 = vmatprep.subr.bf16.mxu0 %v2570
    %2696 = vmatpush2.bf16.msra.mxu0 %v2569
    %2697 = vmatprep.subr.bf16.mxu0 %v2568
    %2698 = vmatpush2.bf16.msra.mxu0 %v2567
    %2699 = vmatprep.subr.bf16.mxu0 %v2566
    %2700 = vmatpush2.bf16.msra.mxu0 %v2565
    %2701 = vmatprep.subr.bf16.mxu0 %v2564
    %2702 = vmatpush2.bf16.msra.mxu0 %v2563
    %2703 = vmatprep.subr.bf16.mxu0 %v2562
    %2704 = vmatpush2.bf16.msra.mxu0 %v2561
    %2705 = vmatprep.mubr.bf16.mxu0 %v2274
    %2706 = vmatmul.mubr.bf16.gmra.mxu0 %v2273
    %v2707 = vpop.f32.mrf.mxu0
    %v2708 = vadd.f32 %v2346, %v2707
    %v2709 = vpop.f32.mrf.mxu0
    %v2710 = vadd.f32 %v2350, %v2709
    %v2711 = vpop.f32.mrf.mxu0
    %v2712 = vpop.f32.mrf.mxu0
    %2713 = vdwg.mxu0
    %2714 = vmatprep.subr.bf16.mxu0 %v2592
    %2715 = vmatpush1.bf16.msra.mxu0 %v2591
    %2716 = vmatprep.subr.bf16.mxu0 %v2590
    %2717 = vmatpush1.bf16.msra.mxu0 %v2589
    %2718 = vmatprep.subr.bf16.mxu0 %v2588
    %2719 = vmatpush1.bf16.msra.mxu0 %v2587
    %2720 = vmatprep.subr.bf16.mxu0 %v2586
    %2721 = vmatpush1.bf16.msra.mxu0 %v2585
    %2722 = vmatprep.subr.bf16.mxu0 %v2584
    %2723 = vmatpush1.bf16.msra.mxu0 %v2583
    %2724 = vmatprep.subr.bf16.mxu0 %v2582
    %2725 = vmatpush1.bf16.msra.mxu0 %v2581
    %2726 = vmatprep.subr.bf16.mxu0 %v2580
    %2727 = vmatpush1.bf16.msra.mxu0 %v2579
    %2728 = vmatprep.subr.bf16.mxu0 %v2578
    %2729 = vmatpush1.bf16.msra.mxu0 %v2577
    %2730 = vmatprep.subr.bf16.mxu0 %v2608
    %2731 = vmatpush2.bf16.msra.mxu0 %v2607
    %2732 = vmatprep.subr.bf16.mxu0 %v2606
    %2733 = vmatpush2.bf16.msra.mxu0 %v2605
    %2734 = vmatprep.subr.bf16.mxu0 %v2604
    %2735 = vmatpush2.bf16.msra.mxu0 %v2603
    %2736 = vmatprep.subr.bf16.mxu0 %v2602
    %2737 = vmatpush2.bf16.msra.mxu0 %v2601
    %2738 = vmatprep.subr.bf16.mxu0 %v2600
    %2739 = vmatpush2.bf16.msra.mxu0 %v2599
    %2740 = vmatprep.subr.bf16.mxu0 %v2598
    %2741 = vmatpush2.bf16.msra.mxu0 %v2597
    %2742 = vmatprep.subr.bf16.mxu0 %v2596
    %2743 = vmatpush2.bf16.msra.mxu0 %v2595
    %2744 = vmatprep.subr.bf16.mxu0 %v2594
    %2745 = vmatpush2.bf16.msra.mxu0 %v2593
    %2746 = vmatprep.mubr.bf16.mxu0 %v2276
    %2747 = vmatmul.mubr.bf16.gmra.mxu0 %v2275
    %v2748 = vpop.f32.mrf.mxu0
    %v2749 = vadd.f32 %v2708, %v2748
    %v2750 = vpop.f32.mrf.mxu0
    %v2751 = vadd.f32 %v2710, %v2750
    %v2752 = vpop.f32.mrf.mxu0
    %v2753 = vpop.f32.mrf.mxu0
    %2754 = vdwg.mxu0
    %vm2755 = vcmp.gt.f32.partialorder %v2749, 0.0
    %vm2756 = vcmp.gt.f32.partialorder %v2751, 0.0
    %v2757 = vmul.f32 %v2749, 0.2
    %v2758 = vmul.f32 %v2751, 0.2
    %v2759 = vsel %vm2755, %v2749, %v2757
    %v2760 = vsel %vm2756, %v2751, %v2758
    %v2761 = vld [vmem:[%s7] sm:$0xff]
    %v2762 = vld [vmem:[%s7 + $0x8] sm:$0xff]
    %2763 = vmatprep.subr.mxu0 0.0
    %2764 = vmatpush1.xpose.msra.mxu0 0.0
    %2765 = vmatprep.subr.mxu0 0.0
    %2766 = vmatpush1.xpose.msra.mxu0 0.0
    %2767 = vmatprep.subr.mxu0 0.0
    %2768 = vmatpush1.xpose.msra.mxu0 0.0
    %2769 = vmatprep.subr.mxu0 0.0
    %2770 = vmatpush1.xpose.msra.mxu0 0.0
    %2771 = vmatprep.subr.mxu0 0.0
    %2772 = vmatpush1.xpose.msra.mxu0 0.0
    %2773 = vmatprep.subr.mxu0 0.0
    %2774 = vmatpush1.xpose.msra.mxu0 0.0
    %2775 = vmatprep.subr.mxu0 0.0
    %2776 = vmatpush1.xpose.msra.mxu0 0.0
    %2777 = vmatprep.subr.mxu0 0.0
    %2778 = vmatpush1.xpose.msra.mxu0 0.0
    %2779 = vmatprep.subr.mxu0 0.0
    %2780 = vmatpush1.xpose.msra.mxu0 0.0
    %2781 = vmatprep.subr.mxu0 0.0
    %2782 = vmatpush1.xpose.msra.mxu0 0.0
    %2783 = vmatprep.subr.mxu0 0.0
    %2784 = vmatpush1.xpose.msra.mxu0 0.0
    %2785 = vmatprep.subr.mxu0 0.0
    %2786 = vmatpush1.xpose.msra.mxu0 0.0
    %2787 = vmatprep.subr.mxu0 0.0
    %2788 = vmatpush1.xpose.msra.mxu0 0.0
    %2789 = vmatprep.subr.mxu0 0.0
    %2790 = vmatpush1.xpose.msra.mxu0 0.0
    %2791 = vmatprep.subr.mxu0 0.0
    %2792 = vmatpush1.xpose.msra.mxu0 0.0
    %2793 = vmatprep.subr.mxu0 %v2760
    %2794 = vmatpush1.xpose.msra.mxu0 %v2759
    %2795 = vmatprep.subr.mxu0 0.0
    %2796 = vmatpush2.xpose.msra.mxu0 0.0
    %2797 = vmatprep.subr.mxu0 0.0
    %2798 = vmatpush2.xpose.msra.mxu0 0.0
    %2799 = vmatprep.subr.mxu0 0.0
    %2800 = vmatpush2.xpose.msra.mxu0 0.0
    %2801 = vmatprep.subr.mxu0 0.0
    %2802 = vmatpush2.xpose.msra.mxu0 0.0
    %2803 = vmatprep.subr.mxu0 0.0
    %2804 = vmatpush2.xpose.msra.mxu0 0.0
    %2805 = vmatprep.subr.mxu0 0.0
    %2806 = vmatpush2.xpose.msra.mxu0 0.0
    %2807 = vmatprep.subr.mxu0 0.0
    %2808 = vmatpush2.xpose.msra.mxu0 0.0
    %2809 = vmatprep.subr.mxu0 0.0
    %2810 = vmatpush2.xpose.msra.mxu0 0.0
    %2811 = vmatprep.subr.mxu0 0.0
    %2812 = vmatpush2.xpose.msra.mxu0 0.0
    %2813 = vmatprep.subr.mxu0 0.0
    %2814 = vmatpush2.xpose.msra.mxu0 0.0
    %2815 = vmatprep.subr.mxu0 0.0
    %2816 = vmatpush2.xpose.msra.mxu0 0.0
    %2817 = vmatprep.subr.mxu0 0.0
    %2818 = vmatpush2.xpose.msra.mxu0 0.0
    %2819 = vmatprep.subr.mxu0 0.0
    %2820 = vmatpush2.xpose.msra.mxu0 0.0
    %2821 = vmatprep.subr.mxu0 0.0
    %2822 = vmatpush2.xpose.msra.mxu0 0.0
    %2823 = vmatprep.subr.mxu0 0.0
    %2824 = vmatpush2.xpose.msra.mxu0 0.0
    %2825 = vmatprep.subr.mxu0 0.0
    %2826 = vmatpush2.xpose.msra.mxu0 0.0
    %2827 = vmatprep.mubr.f32.mxu0 %v2762
    %2828 = vmatmul.mubr.f32.gmra.mxu0 %v2761
    %v2829 = vpop.f32.mrf.mxu0
    %v2830 = vadd.f32 0.0, %v2829
    %v2831 = vpop.f32.mrf.mxu0
    %2832 = vdwg.mxu0
    %s2833 = sld [smem:[#allocation2]]
    %v2834 = vstv %s2833
    %v2835 = vadd.f32 %v2830, %v2834
    %vm2836 = vcmask 57344
    %2837 = vst.msk [vmem:[#allocation3] sm:$0x1] %vm2836, %v2835
    // Predicated region
    $region38: #{discriminator_forward.1} parent=1 // pred_check
      _
    $region39: #{discriminator_forward.1} parent=1 // pred_check_branch
      %2839 = sbr.rel (0) target = $region41
    $region40: #{discriminator_forward.1} parent=1 // pred_region
      %s2841 = ssub.s32 16, 16
      %2842 = vsyncadd [#allocation4], %s2841
      %s2844 = sshll.u32 [#allocation3], 4
      %s2845 = int_to_ptr.vmem [resolvable:$true] %s2844
      %2847 = dma.vmem_to_hbm [thread:$0]  %s2845, 16, %s9, [#allocation4]
    $region41: #{discriminator_forward.1} parent=1 // pred_fallthru
      _
    // Predicated region
    $region42: #{discriminator_forward.1} parent=1 // pred_check
      _
    $region43: #{discriminator_forward.1} parent=1 // pred_check_branch
      %2849 = sbr.rel (0) target = $region45
    $region44: #{discriminator_forward.1} parent=1 // pred_region
      %2850 = dma.done [#allocation4], 16
    $region45: #{discriminator_forward.1} parent=1 // pred_fallthru
      _
    %2851 = vsyncpa [#allocation4], 1

</llo_original>
